<compile_context>
chip_gen: v7x
topology: tpu7x:2x2x1
jax: 0.10.0
libtpu: 0.0.40
codegen_flags: <defaults>
</compile_context>

<pallas_src>
import math
from functools import partial

import jax
import jax.numpy as jnp
from jax import lax
from jax.experimental import pallas as pl
from jax.experimental.pallas import tpu as pltpu


# ----------------------------------------------------------------------------
# helpers
# ----------------------------------------------------------------------------
def _round_up(x, m):
    return ((x + m - 1) // m) * m


def _vmem_limit(*byte_counts):
    need = int(sum(byte_counts)) + 4 * 1024 * 1024          # slack for compiler scratch
    return max(need, 32 * 1024 * 1024)


def _const_spec(shape, single_buffer):
    """BlockSpec for a grid-invariant (weight / LN-param) operand."""
    index_map = lambda *_: (0,) * len(shape)
    if single_buffer:
        # constant block index -> never re-fetched; single-buffer to halve VMEM residency
        return pl.BlockSpec(shape, index_map, pipeline_mode=pl.Buffered(1))
    return pl.BlockSpec(shape, index_map)


# ----------------------------------------------------------------------------
# Pallas kernels
# ----------------------------------------------------------------------------
def _cross_attn_ln_kernel(q_ref, k_ref, v_ref, wqkv_ref, bqkv_ref, wo_ref, bo_ref,
                          g_ref, beta_ref, o_ref, attn_sc, *, n_head):
    """Per (batch, q-tile) block: out = q + LayerNorm(out_proj(MHA(q, k, v)))."""
    tq, d = q_ref.shape
    hd = d // n_head
    f32, bf16 = jnp.float32, jnp.bfloat16

    q_in = q_ref[...]                     # residual (input dtype)
    qb = q_in.astype(bf16)
    kb = k_ref[...].astype(bf16)
    vb = v_ref[...].astype(bf16)

    # Fused in-projection.  Weight is pre-transposed to (d, 3d) bf16; the 1/sqrt(hd)
    # scale is already folded into the q columns / q bias.
    qp = jnp.dot(qb, wqkv_ref[:, 0:d], preferred_element_type=f32) + bqkv_ref[0:1, :]
    kp = jnp.dot(kb, wqkv_ref[:, d:2 * d], preferred_element_type=f32) + bqkv_ref[1:2, :]
    vp = jnp.dot(vb, wqkv_ref[:, 2 * d:3 * d], preferred_element_type=f32) + bqkv_ref[2:3, :]

    qpb, kpb, vpb = qp.astype(bf16), kp.astype(bf16), vp.astype(bf16)

    # Per-head attention; each head's PV result goes straight into its static lane
    # slice of the (tq, d) VMEM scratch (no lane-dim concatenate, short live ranges).
    for h in range(n_head):
        sl = slice(h * hd, (h + 1) * hd)
        s = lax.dot_general(qpb[:, sl], kpb[:, sl], (((1,), (1,)), ((), ())),
                            preferred_element_type=f32)              # (tq, Lk)
        s = s - jnp.max(s, axis=-1, keepdims=True)
        p = jnp.exp(s)
        p = p * pl.reciprocal(jnp.sum(p, axis=-1, keepdims=True), approx=True)
        attn_sc[:, sl] = jnp.dot(p.astype(bf16), vpb[:, sl],
                                 preferred_element_type=f32).astype(bf16)

    # Out-projection (pre-transposed (d, d) bf16 weight) + LayerNorm + residual.
    y = jnp.dot(attn_sc[...], wo_ref[...], preferred_element_type=f32) + bo_ref[...]
    mu = jnp.mean(y, axis=-1, keepdims=True)
    var = jnp.mean((y - mu) ** 2, axis=-1, keepdims=True)
    yn = (y - mu) * lax.rsqrt(var + 1e-5) * g_ref[...] + beta_ref[...]
    o_ref[...] = (q_in.astype(f32) + yn).astype(o_ref.dtype)


def _ln_mlp_residual_kernel(x_ref, g_ref, b_ref, w1_ref, b1_ref, w2_ref, b2_ref, o_ref):
    """Row block: out = x + c_proj(gelu(c_fc(LayerNorm(x)))).  Exact-erf GELU (nn.GELU)."""
    f32, bf16 = jnp.float32, jnp.bfloat16
    x = x_ref[...].astype(f32)
    mu = jnp.mean(x, axis=-1, keepdims=True)
    var = jnp.mean((x - mu) ** 2, axis=-1, keepdims=True)
    xn = (x - mu) * lax.rsqrt(var + 1e-5) * g_ref[...] + b_ref[...]
    h = jnp.dot(xn.astype(bf16), w1_ref[...], preferred_element_type=f32) + b1_ref[...]
    h = 0.5 * h * (1.0 + lax.erf(h * (1.0 / math.sqrt(2.0))))
    y = jnp.dot(h.astype(bf16), w2_ref[...], preferred_element_type=f32) + b2_ref[...]
    o_ref[...] = (x + y).astype(o_ref.dtype)


# ----------------------------------------------------------------------------
# Wrappers
# ----------------------------------------------------------------------------
def _prepare_attn_params(p, scale):
    """PyTorch-layout MHA params -> transposed bf16 weights, scale folded into q rows."""
    d = p["out_w"].shape[0]
    w, b = p["in_w"], p["in_b"]
    wq, wk, wv = w[:d], w[d:2 * d], w[2 * d:]
    in_w_t = jnp.concatenate([wq.T * scale, wk.T, wv.T], axis=1).astype(jnp.bfloat16)  # (d, 3d)
    in_b3 = jnp.stack([b[:d] * scale, b[d:2 * d], b[2 * d:]], axis=0)                  # (3, d) f32
    out_w_t = jnp.transpose(p["out_w"]).astype(jnp.bfloat16)                           # (d, d)
    out_b = p["out_b"].reshape(1, d)
    return in_w_t, in_b3, out_w_t, out_b


def fused_cross_attention(q, k, v, attn_params, ln_g, ln_b, n_head, *,
                          q_row_block=256, single_buffer_weights=True):
    """Batch-major q: (N, Lq, d); k, v: (N, Lk, d).
    Returns q + LayerNorm(MultiheadAttention(q, k, v)) as (N, Lq, d)."""
    N, Lq, d = q.shape
    Lk = k.shape[1]
    hd = d // n_head
    scale = 1.0 / math.sqrt(hd)
    in_w_t, in_b3, out_w_t, out_b = _prepare_attn_params(attn_params, scale)

    # q row tiling (second "parallel" grid axis), padded to a multiple of the tile.
    tq = min(q_row_block, _round_up(Lq, 8))
    Lq_pad = _round_up(Lq, tq)
    if Lq_pad != Lq:
        q = jnp.pad(q, ((0, 0), (0, Lq_pad - Lq), (0, 0)))
    grid = (N, Lq_pad // tq)

    wspec = lambda shape: _const_spec(shape, single_buffer_weights)
    act_bytes = 4 * (2 * tq * d + 2 * Lk * d) * 2                       # q/out + k/v, dbl-buffered
    wt_bytes = 2 * (3 * d * d + d * d) * (1 if single_buffer_weights else 2)
    vmem_limit = _vmem_limit(act_bytes, wt_bytes, 2 * tq * d)

    out = pl.pallas_call(
        partial(_cross_attn_ln_kernel, n_head=n_head),
        out_shape=jax.ShapeDtypeStruct((N, Lq_pad, d), q.dtype),
        grid=grid,
        in_specs=[
            pl.BlockSpec((None, tq, d), lambda b, i: (b, i, 0)),   # q (also residual)
            pl.BlockSpec((None, Lk, d), lambda b, i: (b, 0, 0)),   # k
            pl.BlockSpec((None, Lk, d), lambda b, i: (b, 0, 0)),   # v
            wspec((d, 3 * d)),     # in_proj weight (transposed, q-scale folded), bf16
            wspec((3, d)),         # in_proj biases (q row pre-scaled), f32
            wspec((d, d)),         # out_proj weight (transposed), bf16
            wspec((1, d)),         # out_proj bias
            wspec((1, d)),         # LN gamma
            wspec((1, d)),         # LN beta
        ],
        out_specs=pl.BlockSpec((None, tq, d), lambda b, i: (b, i, 0)),
        scratch_shapes=[pltpu.VMEM((tq, d), jnp.bfloat16)],
        compiler_params=pltpu.CompilerParams(
            dimension_semantics=("parallel", "parallel"),
            vmem_limit_bytes=vmem_limit),
    )(q, k, v, in_w_t, in_b3, out_w_t, out_b, ln_g.reshape(1, d), ln_b.reshape(1, d))
    return out[:, :Lq, :]


def ln_mlp_residual(x, gamma, beta, fc_w_t, fc_b, proj_w_t, proj_b, *,
                    row_block=512, single_buffer_weights=True):
    """Batch-major x: (N, L, d). Returns x + mlp(LayerNorm(x)).
    fc_w_t: (d, 4d) bf16, proj_w_t: (4d, d) bf16 (already transposed)."""
    N, L, d = x.shape
    dh = fc_w_t.shape[1]
    M = N * L
    x2 = x.reshape(M, d)

    bm = min(row_block, _round_up(M, 8))
    M_pad = _round_up(M, bm)
    if M_pad != M:                      # cdiv-style grid with zero padding (keeps pipelining)
        x2 = jnp.pad(x2, ((0, M_pad - M), (0, 0)))
    grid = (M_pad // bm,)

    wspec = lambda shape: _const_spec(shape, single_buffer_weights)
    act_bytes = 4 * (2 * bm * d) * 2
    wt_bytes = 2 * (2 * d * dh) * (1 if single_buffer_weights else 2)
    vmem_limit = _vmem_limit(act_bytes, wt_bytes)

    out = pl.pallas_call(
        _ln_mlp_residual_kernel,
        out_shape=jax.ShapeDtypeStruct((M_pad, d), x.dtype),
        grid=grid,
        in_specs=[
            pl.BlockSpec((bm, d), lambda i: (i, 0)),
            wspec((1, d)), wspec((1, d)),        # LN gamma / beta
            wspec((d, dh)), wspec((1, dh)),      # c_fc   (transposed) + bias
            wspec((dh, d)), wspec((1, d)),       # c_proj (transposed) + bias
        ],
        out_specs=pl.BlockSpec((bm, d), lambda i: (i, 0)),
        compiler_params=pltpu.CompilerParams(
            dimension_semantics=("parallel",),
            vmem_limit_bytes=vmem_limit),
    )(x2, gamma.reshape(1, d), beta.reshape(1, d),
      fc_w_t, fc_b.reshape(1, dh), proj_w_t, proj_b.reshape(1, d))
    return out[:M].reshape(N, L, d)


def residual_agent_attention_block(agent, text, vis, params, n_head):
    """Matches ResidualAgentAttentionBlock.forward (attn_mask=None).
    agent: (L_a, N, d), text: (L_t, N, d), vis: (L_v, N, d) -> (L_v, N, d)."""
    def forward(single_buffer_weights):
        # single layout change to batch-major at the boundary (layout plumbing only)
        agent_b = jnp.transpose(agent, (1, 0, 2))
        text_b = jnp.transpose(text, (1, 0, 2))
        vis_b = jnp.transpose(vis, (1, 0, 2))

        # v = agent + ln_1(attn1(agent, text, text))
        v_b = fused_cross_attention(agent_b, text_b, text_b, params["attn1"],
                                    params["ln1_g"], params["ln1_b"], n_head,
                                    single_buffer_weights=single_buffer_weights)
        # x = vis + ln_2(attn2(vis, agent, v))
        x_b = fused_cross_attention(vis_b, agent_b, v_b, params["attn2"],
                                    params["ln2_g"], params["ln2_b"], n_head,
                                    single_buffer_weights=single_buffer_weights)
        # x = x + mlp(ln_3(x))
        x_b = ln_mlp_residual(x_b, params["ln3_g"], params["ln3_b"],
                              params["fc_w"].T.astype(jnp.bfloat16), params["fc_b"],
                              params["proj_w"].T.astype(jnp.bfloat16), params["proj_b"],
                              single_buffer_weights=single_buffer_weights)
        return jnp.transpose(x_b, (1, 0, 2))

    try:
        return forward(True)
    except Exception:
        # pipeline_mode=pl.Buffered(1) not supported on this jax build -> default buffering
        return forward(False)


# ----------------------------------------------------------------------------
# Pure-JAX f32 reference (for correctness check)
# ----------------------------------------------------------------------------
def _ref_mha(q, k, v, p, n_head):
    Lq, N, d = q.shape
    Lk = k.shape[0]
    hd = d // n_head
    w, b = p["in_w"], p["in_b"]
    qp = q @ w[:d].T + b[:d]
    kp = k @ w[d:2 * d].T + b[d:2 * d]
    vp = v @ w[2 * d:].T + b[2 * d:]

    def split(x, L):
        return x.reshape(L, N, n_head, hd).transpose(1, 2, 0, 3)

    qh, kh, vh = split(qp, Lq), split(kp, Lk), split(vp, Lk)
    s = jnp.einsum("bhqd,bhkd->bhqk", qh, kh) / math.sqrt(hd)
    a = jax.nn.softmax(s, axis=-1)
    o = jnp.einsum("bhqk,bhkd->bhqd", a, vh)
    o = o.transpose(2, 0, 1, 3).reshape(Lq, N, d)
    return o @ p["out_w"].T + p["out_b"]


def _ref_forward(agent, text, vis, params, n_head):
    def ln(x, g, b):
        mu = jnp.mean(x, -1, keepdims=True)
        var = jnp.mean((x - mu) ** 2, -1, keepdims=True)
        return (x - mu) / jnp.sqrt(var + 1e-5) * g + b

    a1 = _ref_mha(agent, text, text, params["attn1"], n_head)
    v = agent + ln(a1, params["ln1_g"], params["ln1_b"])
    a2 = _ref_mha(vis, agent, v, params["attn2"], n_head)
    x = vis + ln(a2, params["ln2_g"], params["ln2_b"])
    h = ln(x, params["ln3_g"], params["ln3_b"])
    h = h @ params["fc_w"].T + params["fc_b"]
    h = 0.5 * h * (1.0 + jax.lax.erf(h / jnp.sqrt(2.0)))
    h = h @ params["proj_w"].T + params["proj_b"]
    return x + h


# ----------------------------------------------------------------------------
# main
# ----------------------------------------------------------------------------
def _init_params(key, d_model):
    ks = jax.random.split(key, 16)
    wscale = 0.02

    def mha_params(k0, k1, k2, k3):
        return {
            "in_w": wscale * jax.random.normal(k0, (3 * d_model, d_model), jnp.float32),
            "in_b": 0.01 * jax.random.normal(k1, (3 * d_model,), jnp.float32),
            "out_w": wscale * jax.random.normal(k2, (d_model, d_model), jnp.float32),
            "out_b": 0.01 * jax.random.normal(k3, (d_model,), jnp.float32),
        }

    return {
        "attn1": mha_params(ks[0], ks[1], ks[2], ks[3]),
        "attn2": mha_params(ks[4], ks[5], ks[6], ks[7]),
        "ln1_g": 1.0 + 0.1 * jax.random.normal(ks[8], (d_model,), jnp.float32),
        "ln1_b": 0.1 * jax.random.normal(ks[9], (d_model,), jnp.float32),
        "ln2_g": 1.0 + 0.1 * jax.random.normal(ks[10], (d_model,), jnp.float32),
        "ln2_b": 0.1 * jax.random.normal(ks[11], (d_model,), jnp.float32),
        "ln3_g": 1.0 + 0.1 * jax.random.normal(ks[12], (d_model,), jnp.float32),
        "ln3_b": 0.1 * jax.random.normal(ks[13], (d_model,), jnp.float32),
        "fc_w": wscale * jax.random.normal(ks[14], (4 * d_model, d_model), jnp.float32),
        "fc_b": jnp.zeros((4 * d_model,), jnp.float32),
        "proj_w": wscale * jax.random.normal(ks[15], (d_model, 4 * d_model), jnp.float32),
        "proj_b": jnp.zeros((d_model,), jnp.float32),
    }


if __name__ == "__main__":
    # lane-dense toy config: d_model multiple of 128, realistic head_dim=64
    d_model, n_head = 128, 2
    batch, L_agent, L_text, L_vis = 2, 8, 16, 16

    key = jax.random.PRNGKey(0)
    k_a, k_t, k_v, k_p = jax.random.split(key, 4)
    agent = jax.random.normal(k_a, (L_agent, batch, d_model), jnp.float32)
    text = jax.random.normal(k_t, (L_text, batch, d_model), jnp.float32)
    vis = jax.random.normal(k_v, (L_vis, batch, d_model), jnp.float32)
    params = _init_params(k_p, d_model)

    out = residual_agent_attention_block(agent, text, vis, params, n_head)
    out = jax.block_until_ready(out)

    ref = _ref_forward(agent, text, vis, params, n_head)
    assert out.shape == (L_vis, batch, d_model)
    assert bool(jnp.all(jnp.isfinite(out)))
    # bf16 MXU inputs (f32 accumulation) vs pure-f32 reference: ~1e-2 typical error
    assert bool(jnp.allclose(out, ref, rtol=5e-2, atol=5e-2)), "mismatch vs reference"

    print("KERNEL_OK")
</pallas_src>

<mosaic_0001>
module attributes {stable_mosaic.version = 11 : i64} {
  func.func @_cross_attn_ln_kernel(%arg0: i32, %arg1: i32, %arg2: memref<1x8x128xf32, #tpu.memory_space<vmem>>, %arg3: memref<1x16x128xf32, #tpu.memory_space<vmem>>, %arg4: memref<1x16x128xf32, #tpu.memory_space<vmem>>, %arg5: memref<128x384xbf16, #tpu.memory_space<vmem>>, %arg6: memref<3x128xf32, #tpu.memory_space<vmem>>, %arg7: memref<128x128xbf16, #tpu.memory_space<vmem>>, %arg8: memref<1x128xf32, #tpu.memory_space<vmem>>, %arg9: memref<1x128xf32, #tpu.memory_space<vmem>>, %arg10: memref<1x128xf32, #tpu.memory_space<vmem>>, %arg11: memref<1x8x128xf32, #tpu.memory_space<vmem>>, %arg12: memref<8x128xbf16, #tpu.memory_space<vmem>>) attributes {dimension_semantics = [#tpu.dimension_semantics<parallel>, #tpu.dimension_semantics<parallel>], iteration_bounds = array<i64: 2, 1>, scalar_prefetch = 0 : i64, scratch_operands = 1 : i64, tpu.core_type = #tpu.core_type<tc>, window_params = [{transform_indices = @transform_0, window_bounds = array<i64: 1, 8, 128>}, {transform_indices = @transform_1, window_bounds = array<i64: 1, 16, 128>}, {transform_indices = @transform_2, window_bounds = array<i64: 1, 16, 128>}, {pipeline_mode = #tpu.pipeline_mode<synchronous>, transform_indices = @transform_3, window_bounds = array<i64: 128, 384>}, {pipeline_mode = #tpu.pipeline_mode<synchronous>, transform_indices = @transform_4, window_bounds = array<i64: 3, 128>}, {pipeline_mode = #tpu.pipeline_mode<synchronous>, transform_indices = @transform_5, window_bounds = array<i64: 128, 128>}, {pipeline_mode = #tpu.pipeline_mode<synchronous>, transform_indices = @transform_6, window_bounds = array<i64: 1, 128>}, {pipeline_mode = #tpu.pipeline_mode<synchronous>, transform_indices = @transform_7, window_bounds = array<i64: 1, 128>}, {pipeline_mode = #tpu.pipeline_mode<synchronous>, transform_indices = @transform_8, window_bounds = array<i64: 1, 128>}, {transform_indices = @transform_9, window_bounds = array<i64: 1, 8, 128>}]} {
    %c0 = arith.constant 0 : index
    %c0_0 = arith.constant 0 : index
    %c0_1 = arith.constant 0 : index
    %0 = vector.load %arg2[%c0, %c0_0, %c0_1] : memref<1x8x128xf32, #tpu.memory_space<vmem>>, vector<1x8x128xf32>
    %1 = vector.shape_cast %0 : vector<1x8x128xf32> to vector<8x128xf32>
    %2 = arith.truncf %1 : vector<8x128xf32> to vector<8x128xbf16>
    %c0_2 = arith.constant 0 : index
    %c0_3 = arith.constant 0 : index
    %c0_4 = arith.constant 0 : index
    %3 = vector.load %arg3[%c0_2, %c0_3, %c0_4] : memref<1x16x128xf32, #tpu.memory_space<vmem>>, vector<1x16x128xf32>
    %4 = vector.shape_cast %3 : vector<1x16x128xf32> to vector<16x128xf32>
    %5 = arith.truncf %4 : vector<16x128xf32> to vector<16x128xbf16>
    %c0_5 = arith.constant 0 : index
    %c0_6 = arith.constant 0 : index
    %c0_7 = arith.constant 0 : index
    %6 = vector.load %arg4[%c0_5, %c0_6, %c0_7] : memref<1x16x128xf32, #tpu.memory_space<vmem>>, vector<1x16x128xf32>
    %7 = vector.shape_cast %6 : vector<1x16x128xf32> to vector<16x128xf32>
    %8 = arith.truncf %7 : vector<16x128xf32> to vector<16x128xbf16>
    %c0_8 = arith.constant 0 : index
    %c0_9 = arith.constant 0 : index
    %9 = vector.load %arg5[%c0_8, %c0_9] : memref<128x384xbf16, #tpu.memory_space<vmem>>, vector<128x128xbf16>
    %cst = arith.constant dense<0.000000e+00> : vector<8x128xf32>
    %10 = tpu.matmul %2, %9, %cst {dimension_numbers = #tpu.dot_dimension_numbers<[1], [0], [0], [1], [0, 0, 1, 1], [], []>} : vector<8x128xbf16>, vector<128x128xbf16>, vector<8x128xf32> -> vector<8x128xf32>
    %c0_10 = arith.constant 0 : index
    %c0_11 = arith.constant 0 : index
    %11 = vector.load %arg6[%c0_10, %c0_11] : memref<3x128xf32, #tpu.memory_space<vmem>>, vector<1x128xf32>
    %12 = vector.broadcast %11 : vector<1x128xf32> to vector<8x128xf32>
    %13 = arith.addf %10, %12 : vector<8x128xf32>
    %c0_12 = arith.constant 0 : index
    %c128 = arith.constant 128 : index
    %14 = vector.load %arg5[%c0_12, %c128] : memref<128x384xbf16, #tpu.memory_space<vmem>>, vector<128x128xbf16>
    %cst_13 = arith.constant dense<0.000000e+00> : vector<16x128xf32>
    %15 = tpu.matmul %5, %14, %cst_13 {dimension_numbers = #tpu.dot_dimension_numbers<[1], [0], [0], [1], [0, 0, 1, 1], [], []>} : vector<16x128xbf16>, vector<128x128xbf16>, vector<16x128xf32> -> vector<16x128xf32>
    %c1 = arith.constant 1 : index
    %c0_14 = arith.constant 0 : index
    %16 = vector.load %arg6[%c1, %c0_14] : memref<3x128xf32, #tpu.memory_space<vmem>>, vector<1x128xf32>
    %17 = vector.broadcast %16 : vector<1x128xf32> to vector<16x128xf32>
    %18 = arith.addf %15, %17 : vector<16x128xf32>
    %c0_15 = arith.constant 0 : index
    %c256 = arith.constant 256 : index
    %19 = vector.load %arg5[%c0_15, %c256] : memref<128x384xbf16, #tpu.memory_space<vmem>>, vector<128x128xbf16>
    %cst_16 = arith.constant dense<0.000000e+00> : vector<16x128xf32>
    %20 = tpu.matmul %8, %19, %cst_16 {dimension_numbers = #tpu.dot_dimension_numbers<[1], [0], [0], [1], [0, 0, 1, 1], [], []>} : vector<16x128xbf16>, vector<128x128xbf16>, vector<16x128xf32> -> vector<16x128xf32>
    %c2 = arith.constant 2 : index
    %c0_17 = arith.constant 0 : index
    %21 = vector.load %arg6[%c2, %c0_17] : memref<3x128xf32, #tpu.memory_space<vmem>>, vector<1x128xf32>
    %22 = vector.broadcast %21 : vector<1x128xf32> to vector<16x128xf32>
    %23 = arith.addf %20, %22 : vector<16x128xf32>
    %24 = arith.truncf %13 : vector<8x128xf32> to vector<8x128xbf16>
    %25 = arith.truncf %18 : vector<16x128xf32> to vector<16x128xbf16>
    %26 = arith.truncf %23 : vector<16x128xf32> to vector<16x128xbf16>
    %27 = vector.extract_strided_slice %24 {offsets = [0, 0], sizes = [8, 64], strides = [1, 1]} : vector<8x128xbf16> to vector<8x64xbf16>
    %28 = vector.extract_strided_slice %25 {offsets = [0, 0], sizes = [16, 64], strides = [1, 1]} : vector<16x128xbf16> to vector<16x64xbf16>
    %cst_18 = arith.constant dense<0.000000e+00> : vector<8x16xf32>
    %29 = tpu.matmul %27, %28, %cst_18 {dimension_numbers = #tpu.dot_dimension_numbers<[1], [1], [0], [0], [0, 0, 1, 0], [], []>} : vector<8x64xbf16>, vector<16x64xbf16>, vector<8x16xf32> -> vector<8x16xf32>
    %cst_19 = arith.constant dense<0xFF800000> : vector<8xf32>
    %30 = vector.multi_reduction <maximumf>, %29, %cst_19 [1] : vector<8x16xf32> to vector<8xf32>
    %31 = vector.shape_cast %30 : vector<8xf32> to vector<8x1xf32>
    %32 = vector.broadcast %31 : vector<8x1xf32> to vector<8x16xf32>
    %33 = arith.subf %29, %32 : vector<8x16xf32>
    %34 = math.exp %33 : vector<8x16xf32>
    %cst_20 = arith.constant dense<0.000000e+00> : vector<8xf32>
    %35 = vector.multi_reduction <add>, %34, %cst_20 [1] : vector<8x16xf32> to vector<8xf32>
    %36 = vector.shape_cast %35 : vector<8xf32> to vector<8x1xf32>
    %37 = tpu.reciprocal %36 {approx = true} : vector<8x1xf32> -> vector<8x1xf32>
    %38 = vector.broadcast %37 : vector<8x1xf32> to vector<8x16xf32>
    %39 = arith.mulf %34, %38 : vector<8x16xf32>
    %40 = arith.truncf %39 : vector<8x16xf32> to vector<8x16xbf16>
    %41 = vector.extract_strided_slice %26 {offsets = [0, 0], sizes = [16, 64], strides = [1, 1]} : vector<16x128xbf16> to vector<16x64xbf16>
    %cst_21 = arith.constant dense<0.000000e+00> : vector<8x64xf32>
    %42 = tpu.matmul %40, %41, %cst_21 {dimension_numbers = #tpu.dot_dimension_numbers<[1], [0], [0], [1], [0, 0, 1, 1], [], []>} : vector<8x16xbf16>, vector<16x64xbf16>, vector<8x64xf32> -> vector<8x64xf32>
    %43 = arith.truncf %42 : vector<8x64xf32> to vector<8x64xbf16>
    %c0_22 = arith.constant 0 : index
    %c0_23 = arith.constant 0 : index
    %44 = vector.load %arg12[%c0_22, %c0_23] : memref<8x128xbf16, #tpu.memory_space<vmem>>, vector<8x64xbf16>
    tpu.vector_store %arg12[%c0_22, %c0_23], %43 {strides = array<i32>} : memref<8x128xbf16, #tpu.memory_space<vmem>>, vector<8x64xbf16>,
    %45 = vector.extract_strided_slice %24 {offsets = [0, 64], sizes = [8, 64], strides = [1, 1]} : vector<8x128xbf16> to vector<8x64xbf16>
    %46 = vector.extract_strided_slice %25 {offsets = [0, 64], sizes = [16, 64], strides = [1, 1]} : vector<16x128xbf16> to vector<16x64xbf16>
    %cst_24 = arith.constant dense<0.000000e+00> : vector<8x16xf32>
    %47 = tpu.matmul %45, %46, %cst_24 {dimension_numbers = #tpu.dot_dimension_numbers<[1], [1], [0], [0], [0, 0, 1, 0], [], []>} : vector<8x64xbf16>, vector<16x64xbf16>, vector<8x16xf32> -> vector<8x16xf32>
    %cst_25 = arith.constant dense<0xFF800000> : vector<8xf32>
    %48 = vector.multi_reduction <maximumf>, %47, %cst_25 [1] : vector<8x16xf32> to vector<8xf32>
    %49 = vector.shape_cast %48 : vector<8xf32> to vector<8x1xf32>
    %50 = vector.broadcast %49 : vector<8x1xf32> to vector<8x16xf32>
    %51 = arith.subf %47, %50 : vector<8x16xf32>
    %52 = math.exp %51 : vector<8x16xf32>
    %cst_26 = arith.constant dense<0.000000e+00> : vector<8xf32>
    %53 = vector.multi_reduction <add>, %52, %cst_26 [1] : vector<8x16xf32> to vector<8xf32>
    %54 = vector.shape_cast %53 : vector<8xf32> to vector<8x1xf32>
    %55 = tpu.reciprocal %54 {approx = true} : vector<8x1xf32> -> vector<8x1xf32>
    %56 = vector.broadcast %55 : vector<8x1xf32> to vector<8x16xf32>
    %57 = arith.mulf %52, %56 : vector<8x16xf32>
    %58 = arith.truncf %57 : vector<8x16xf32> to vector<8x16xbf16>
    %59 = vector.extract_strided_slice %26 {offsets = [0, 64], sizes = [16, 64], strides = [1, 1]} : vector<16x128xbf16> to vector<16x64xbf16>
    %cst_27 = arith.constant dense<0.000000e+00> : vector<8x64xf32>
    %60 = tpu.matmul %58, %59, %cst_27 {dimension_numbers = #tpu.dot_dimension_numbers<[1], [0], [0], [1], [0, 0, 1, 1], [], []>} : vector<8x16xbf16>, vector<16x64xbf16>, vector<8x64xf32> -> vector<8x64xf32>
    %61 = arith.truncf %60 : vector<8x64xf32> to vector<8x64xbf16>
    %c0_28 = arith.constant 0 : index
    %c64 = arith.constant 64 : index
    %62 = vector.load %arg12[%c0_28, %c64] : memref<8x128xbf16, #tpu.memory_space<vmem>>, vector<8x64xbf16>
    tpu.vector_store %arg12[%c0_28, %c64], %61 {strides = array<i32>} : memref<8x128xbf16, #tpu.memory_space<vmem>>, vector<8x64xbf16>,
    %c0_29 = arith.constant 0 : index
    %c0_30 = arith.constant 0 : index
    %63 = vector.load %arg12[%c0_29, %c0_30] : memref<8x128xbf16, #tpu.memory_space<vmem>>, vector<8x128xbf16>
    %c0_31 = arith.constant 0 : index
    %c0_32 = arith.constant 0 : index
    %64 = vector.load %arg7[%c0_31, %c0_32] : memref<128x128xbf16, #tpu.memory_space<vmem>>, vector<128x128xbf16>
    %cst_33 = arith.constant dense<0.000000e+00> : vector<8x128xf32>
    %65 = tpu.matmul %63, %64, %cst_33 {dimension_numbers = #tpu.dot_dimension_numbers<[1], [0], [0], [1], [0, 0, 1, 1], [], []>} : vector<8x128xbf16>, vector<128x128xbf16>, vector<8x128xf32> -> vector<8x128xf32>
    %c0_34 = arith.constant 0 : index
    %c0_35 = arith.constant 0 : index
    %66 = vector.load %arg8[%c0_34, %c0_35] : memref<1x128xf32, #tpu.memory_space<vmem>>, vector<1x128xf32>
    %67 = vector.broadcast %66 : vector<1x128xf32> to vector<8x128xf32>
    %68 = arith.addf %65, %67 : vector<8x128xf32>
    %cst_36 = arith.constant dense<0.000000e+00> : vector<8xf32>
    %69 = vector.multi_reduction <add>, %68, %cst_36 [1] : vector<8x128xf32> to vector<8xf32>
    %70 = vector.shape_cast %69 : vector<8xf32> to vector<8x1xf32>
    %cst_37 = arith.constant 1.280000e+02 : f32
    %71 = vector.broadcast %cst_37 : f32 to vector<8x1xf32>
    %72 = arith.divf %70, %71 : vector<8x1xf32>
    %73 = vector.broadcast %72 : vector<8x1xf32> to vector<8x128xf32>
    %74 = arith.subf %68, %73 : vector<8x128xf32>
    %75 = arith.mulf %74, %74 : vector<8x128xf32>
    %cst_38 = arith.constant dense<0.000000e+00> : vector<8xf32>
    %76 = vector.multi_reduction <add>, %75, %cst_38 [1] : vector<8x128xf32> to vector<8xf32>
    %77 = vector.shape_cast %76 : vector<8xf32> to vector<8x1xf32>
    %cst_39 = arith.constant 1.280000e+02 : f32
    %78 = vector.broadcast %cst_39 : f32 to vector<8x1xf32>
    %79 = arith.divf %77, %78 : vector<8x1xf32>
    %80 = vector.broadcast %72 : vector<8x1xf32> to vector<8x128xf32>
    %81 = arith.subf %68, %80 : vector<8x128xf32>
    %cst_40 = arith.constant 9.99999974E-6 : f32
    %82 = vector.broadcast %cst_40 : f32 to vector<8x1xf32>
    %83 = arith.addf %79, %82 : vector<8x1xf32>
    %84 = math.rsqrt %83 : vector<8x1xf32>
    %85 = vector.broadcast %84 : vector<8x1xf32> to vector<8x128xf32>
    %86 = arith.mulf %81, %85 : vector<8x128xf32>
    %c0_41 = arith.constant 0 : index
    %c0_42 = arith.constant 0 : index
    %87 = vector.load %arg9[%c0_41, %c0_42] : memref<1x128xf32, #tpu.memory_space<vmem>>, vector<1x128xf32>
    %88 = vector.broadcast %87 : vector<1x128xf32> to vector<8x128xf32>
    %89 = arith.mulf %86, %88 : vector<8x128xf32>
    %c0_43 = arith.constant 0 : index
    %c0_44 = arith.constant 0 : index
    %90 = vector.load %arg10[%c0_43, %c0_44] : memref<1x128xf32, #tpu.memory_space<vmem>>, vector<1x128xf32>
    %91 = vector.broadcast %90 : vector<1x128xf32> to vector<8x128xf32>
    %92 = arith.addf %89, %91 : vector<8x128xf32>
    %93 = arith.addf %1, %92 : vector<8x128xf32>
    %c0_45 = arith.constant 0 : index
    %c0_46 = arith.constant 0 : index
    %c0_47 = arith.constant 0 : index
    %94 = vector.load %arg11[%c0_45, %c0_46, %c0_47] : memref<1x8x128xf32, #tpu.memory_space<vmem>>, vector<1x8x128xf32>
    %95 = vector.shape_cast %94 : vector<1x8x128xf32> to vector<8x128xf32>
    %96 = vector.shape_cast %93 : vector<8x128xf32> to vector<1x8x128xf32>
    tpu.vector_store %arg11[%c0_45, %c0_46, %c0_47], %96 {strides = array<i32>} : memref<1x8x128xf32, #tpu.memory_space<vmem>>, vector<1x8x128xf32>,
    return
  }
  func.func @transform_0(%arg0: i32, %arg1: i32) -> (i32, i32, i32) {
    %c0_i32 = arith.constant 0 : i32
    %c0_i32_0 = arith.constant 0 : i32
    return %arg0, %arg1, %c0_i32 : i32, i32, i32
  }
  func.func @transform_1(%arg0: i32, %arg1: i32) -> (i32, i32, i32) {
    %c0_i32 = arith.constant 0 : i32
    %c0_i32_0 = arith.constant 0 : i32
    %c0_i32_1 = arith.constant 0 : i32
    return %arg0, %c0_i32, %c0_i32_0 : i32, i32, i32
  }
  func.func @transform_2(%arg0: i32, %arg1: i32) -> (i32, i32, i32) {
    %c0_i32 = arith.constant 0 : i32
    %c0_i32_0 = arith.constant 0 : i32
    %c0_i32_1 = arith.constant 0 : i32
    return %arg0, %c0_i32, %c0_i32_0 : i32, i32, i32
  }
  func.func @transform_3(%arg0: i32, %arg1: i32) -> (i32, i32) {
    %c0_i32 = arith.constant 0 : i32
    %c0_i32_0 = arith.constant 0 : i32
    %c0_i32_1 = arith.constant 0 : i32
    return %c0_i32, %c0_i32_0 : i32, i32
  }
  func.func @transform_4(%arg0: i32, %arg1: i32) -> (i32, i32) {
    %c0_i32 = arith.constant 0 : i32
    %c0_i32_0 = arith.constant 0 : i32
    %c0_i32_1 = arith.constant 0 : i32
    return %c0_i32, %c0_i32_0 : i32, i32
  }
  func.func @transform_5(%arg0: i32, %arg1: i32) -> (i32, i32) {
    %c0_i32 = arith.constant 0 : i32
    %c0_i32_0 = arith.constant 0 : i32
    %c0_i32_1 = arith.constant 0 : i32
    return %c0_i32, %c0_i32_0 : i32, i32
  }
  func.func @transform_6(%arg0: i32, %arg1: i32) -> (i32, i32) {
    %c0_i32 = arith.constant 0 : i32
    %c0_i32_0 = arith.constant 0 : i32
    %c0_i32_1 = arith.constant 0 : i32
    return %c0_i32, %c0_i32_0 : i32, i32
  }
  func.func @transform_7(%arg0: i32, %arg1: i32) -> (i32, i32) {
    %c0_i32 = arith.constant 0 : i32
    %c0_i32_0 = arith.constant 0 : i32
    %c0_i32_1 = arith.constant 0 : i32
    return %c0_i32, %c0_i32_0 : i32, i32
  }
  func.func @transform_8(%arg0: i32, %arg1: i32) -> (i32, i32) {
    %c0_i32 = arith.constant 0 : i32
    %c0_i32_0 = arith.constant 0 : i32
    %c0_i32_1 = arith.constant 0 : i32
    return %c0_i32, %c0_i32_0 : i32, i32
  }
  func.func @transform_9(%arg0: i32, %arg1: i32) -> (i32, i32, i32) {
    %c0_i32 = arith.constant 0 : i32
    %c0_i32_0 = arith.constant 0 : i32
    return %arg0, %arg1, %c0_i32 : i32, i32, i32
  }
}

module attributes {stable_mosaic.version = 11 : i64} {
  func.func @_cross_attn_ln_kernel(%arg0: i32, %arg1: i32, %arg2: memref<1x8x128xf32, #tpu.memory_space<vmem>>, %arg3: memref<1x16x128xf32, #tpu.memory_space<vmem>>, %arg4: memref<1x16x128xf32, #tpu.memory_space<vmem>>, %arg5: memref<128x384xbf16, #tpu.memory_space<vmem>>, %arg6: memref<3x128xf32, #tpu.memory_space<vmem>>, %arg7: memref<128x128xbf16, #tpu.memory_space<vmem>>, %arg8: memref<1x128xf32, #tpu.memory_space<vmem>>, %arg9: memref<1x128xf32, #tpu.memory_space<vmem>>, %arg10: memref<1x128xf32, #tpu.memory_space<vmem>>, %arg11: memref<1x8x128xf32, #tpu.memory_space<vmem>>, %arg12: memref<8x128xbf16, #tpu.memory_space<vmem>>) attributes {dimension_semantics = [#tpu.dimension_semantics<parallel>, #tpu.dimension_semantics<parallel>], iteration_bounds = array<i64: 2, 1>, scalar_prefetch = 0 : i64, scratch_operands = 1 : i64, tpu.core_type = #tpu.core_type<tc>, window_params = [{transform_indices = @transform_0, window_bounds = array<i64: 1, 8, 128>}, {transform_indices = @transform_1, window_bounds = array<i64: 1, 16, 128>}, {transform_indices = @transform_2, window_bounds = array<i64: 1, 16, 128>}, {pipeline_mode = #tpu.pipeline_mode<synchronous>, transform_indices = @transform_3, window_bounds = array<i64: 128, 384>}, {pipeline_mode = #tpu.pipeline_mode<synchronous>, transform_indices = @transform_4, window_bounds = array<i64: 3, 128>}, {pipeline_mode = #tpu.pipeline_mode<synchronous>, transform_indices = @transform_5, window_bounds = array<i64: 128, 128>}, {pipeline_mode = #tpu.pipeline_mode<synchronous>, transform_indices = @transform_6, window_bounds = array<i64: 1, 128>}, {pipeline_mode = #tpu.pipeline_mode<synchronous>, transform_indices = @transform_7, window_bounds = array<i64: 1, 128>}, {pipeline_mode = #tpu.pipeline_mode<synchronous>, transform_indices = @transform_8, window_bounds = array<i64: 1, 128>}, {transform_indices = @transform_9, window_bounds = array<i64: 1, 8, 128>}]} {
    %c0 = arith.constant 0 : index
    %c0_0 = arith.constant 0 : index
    %c0_1 = arith.constant 0 : index
    %0 = vector.load %arg2[%c0, %c0_0, %c0_1] : memref<1x8x128xf32, #tpu.memory_space<vmem>>, vector<1x8x128xf32>
    %1 = vector.shape_cast %0 : vector<1x8x128xf32> to vector<8x128xf32>
    %2 = arith.truncf %1 : vector<8x128xf32> to vector<8x128xbf16>
    %c0_2 = arith.constant 0 : index
    %c0_3 = arith.constant 0 : index
    %c0_4 = arith.constant 0 : index
    %3 = vector.load %arg3[%c0_2, %c0_3, %c0_4] : memref<1x16x128xf32, #tpu.memory_space<vmem>>, vector<1x16x128xf32>
    %4 = vector.shape_cast %3 : vector<1x16x128xf32> to vector<16x128xf32>
    %5 = arith.truncf %4 : vector<16x128xf32> to vector<16x128xbf16>
    %c0_5 = arith.constant 0 : index
    %c0_6 = arith.constant 0 : index
    %c0_7 = arith.constant 0 : index
    %6 = vector.load %arg4[%c0_5, %c0_6, %c0_7] : memref<1x16x128xf32, #tpu.memory_space<vmem>>, vector<1x16x128xf32>
    %7 = vector.shape_cast %6 : vector<1x16x128xf32> to vector<16x128xf32>
    %8 = arith.truncf %7 : vector<16x128xf32> to vector<16x128xbf16>
    %c0_8 = arith.constant 0 : index
    %c0_9 = arith.constant 0 : index
    %9 = vector.load %arg5[%c0_8, %c0_9] : memref<128x384xbf16, #tpu.memory_space<vmem>>, vector<128x128xbf16>
    %cst = arith.constant dense<0.000000e+00> : vector<8x128xf32>
    %10 = tpu.matmul %2, %9, %cst {dimension_numbers = #tpu.dot_dimension_numbers<[1], [0], [0], [1], [0, 0, 1, 1], [], []>} : vector<8x128xbf16>, vector<128x128xbf16>, vector<8x128xf32> -> vector<8x128xf32>
    %c0_10 = arith.constant 0 : index
    %c0_11 = arith.constant 0 : index
    %11 = vector.load %arg6[%c0_10, %c0_11] : memref<3x128xf32, #tpu.memory_space<vmem>>, vector<1x128xf32>
    %12 = vector.broadcast %11 : vector<1x128xf32> to vector<8x128xf32>
    %13 = arith.addf %10, %12 : vector<8x128xf32>
    %c0_12 = arith.constant 0 : index
    %c128 = arith.constant 128 : index
    %14 = vector.load %arg5[%c0_12, %c128] : memref<128x384xbf16, #tpu.memory_space<vmem>>, vector<128x128xbf16>
    %cst_13 = arith.constant dense<0.000000e+00> : vector<16x128xf32>
    %15 = tpu.matmul %5, %14, %cst_13 {dimension_numbers = #tpu.dot_dimension_numbers<[1], [0], [0], [1], [0, 0, 1, 1], [], []>} : vector<16x128xbf16>, vector<128x128xbf16>, vector<16x128xf32> -> vector<16x128xf32>
    %c1 = arith.constant 1 : index
    %c0_14 = arith.constant 0 : index
    %16 = vector.load %arg6[%c1, %c0_14] : memref<3x128xf32, #tpu.memory_space<vmem>>, vector<1x128xf32>
    %17 = vector.broadcast %16 : vector<1x128xf32> to vector<16x128xf32>
    %18 = arith.addf %15, %17 : vector<16x128xf32>
    %c0_15 = arith.constant 0 : index
    %c256 = arith.constant 256 : index
    %19 = vector.load %arg5[%c0_15, %c256] : memref<128x384xbf16, #tpu.memory_space<vmem>>, vector<128x128xbf16>
    %cst_16 = arith.constant dense<0.000000e+00> : vector<16x128xf32>
    %20 = tpu.matmul %8, %19, %cst_16 {dimension_numbers = #tpu.dot_dimension_numbers<[1], [0], [0], [1], [0, 0, 1, 1], [], []>} : vector<16x128xbf16>, vector<128x128xbf16>, vector<16x128xf32> -> vector<16x128xf32>
    %c2 = arith.constant 2 : index
    %c0_17 = arith.constant 0 : index
    %21 = vector.load %arg6[%c2, %c0_17] : memref<3x128xf32, #tpu.memory_space<vmem>>, vector<1x128xf32>
    %22 = vector.broadcast %21 : vector<1x128xf32> to vector<16x128xf32>
    %23 = arith.addf %20, %22 : vector<16x128xf32>
    %24 = arith.truncf %13 : vector<8x128xf32> to vector<8x128xbf16>
    %25 = arith.truncf %18 : vector<16x128xf32> to vector<16x128xbf16>
    %26 = arith.truncf %23 : vector<16x128xf32> to vector<16x128xbf16>
    %27 = vector.extract_strided_slice %24 {offsets = [0, 0], sizes = [8, 64], strides = [1, 1]} : vector<8x128xbf16> to vector<8x64xbf16>
    %28 = vector.extract_strided_slice %25 {offsets = [0, 0], sizes = [16, 64], strides = [1, 1]} : vector<16x128xbf16> to vector<16x64xbf16>
    %cst_18 = arith.constant dense<0.000000e+00> : vector<8x16xf32>
    %29 = tpu.matmul %27, %28, %cst_18 {dimension_numbers = #tpu.dot_dimension_numbers<[1], [1], [0], [0], [0, 0, 1, 0], [], []>} : vector<8x64xbf16>, vector<16x64xbf16>, vector<8x16xf32> -> vector<8x16xf32>
    %cst_19 = arith.constant dense<0xFF800000> : vector<8xf32>
    %30 = vector.multi_reduction <maximumf>, %29, %cst_19 [1] : vector<8x16xf32> to vector<8xf32>
    %31 = vector.shape_cast %30 : vector<8xf32> to vector<8x1xf32>
    %32 = vector.broadcast %31 : vector<8x1xf32> to vector<8x16xf32>
    %33 = arith.subf %29, %32 : vector<8x16xf32>
    %34 = math.exp %33 : vector<8x16xf32>
    %cst_20 = arith.constant dense<0.000000e+00> : vector<8xf32>
    %35 = vector.multi_reduction <add>, %34, %cst_20 [1] : vector<8x16xf32> to vector<8xf32>
    %36 = vector.shape_cast %35 : vector<8xf32> to vector<8x1xf32>
    %37 = tpu.reciprocal %36 {approx = true} : vector<8x1xf32> -> vector<8x1xf32>
    %38 = vector.broadcast %37 : vector<8x1xf32> to vector<8x16xf32>
    %39 = arith.mulf %34, %38 : vector<8x16xf32>
    %40 = arith.truncf %39 : vector<8x16xf32> to vector<8x16xbf16>
    %41 = vector.extract_strided_slice %26 {offsets = [0, 0], sizes = [16, 64], strides = [1, 1]} : vector<16x128xbf16> to vector<16x64xbf16>
    %cst_21 = arith.constant dense<0.000000e+00> : vector<8x64xf32>
    %42 = tpu.matmul %40, %41, %cst_21 {dimension_numbers = #tpu.dot_dimension_numbers<[1], [0], [0], [1], [0, 0, 1, 1], [], []>} : vector<8x16xbf16>, vector<16x64xbf16>, vector<8x64xf32> -> vector<8x64xf32>
    %43 = arith.truncf %42 : vector<8x64xf32> to vector<8x64xbf16>
    %c0_22 = arith.constant 0 : index
    %c0_23 = arith.constant 0 : index
    %44 = vector.load %arg12[%c0_22, %c0_23] : memref<8x128xbf16, #tpu.memory_space<vmem>>, vector<8x64xbf16>
    tpu.vector_store %arg12[%c0_22, %c0_23], %43 {strides = array<i32>} : memref<8x128xbf16, #tpu.memory_space<vmem>>, vector<8x64xbf16>,
    %45 = vector.extract_strided_slice %24 {offsets = [0, 64], sizes = [8, 64], strides = [1, 1]} : vector<8x128xbf16> to vector<8x64xbf16>
    %46 = vector.extract_strided_slice %25 {offsets = [0, 64], sizes = [16, 64], strides = [1, 1]} : vector<16x128xbf16> to vector<16x64xbf16>
    %cst_24 = arith.constant dense<0.000000e+00> : vector<8x16xf32>
    %47 = tpu.matmul %45, %46, %cst_24 {dimension_numbers = #tpu.dot_dimension_numbers<[1], [1], [0], [0], [0, 0, 1, 0], [], []>} : vector<8x64xbf16>, vector<16x64xbf16>, vector<8x16xf32> -> vector<8x16xf32>
    %cst_25 = arith.constant dense<0xFF800000> : vector<8xf32>
    %48 = vector.multi_reduction <maximumf>, %47, %cst_25 [1] : vector<8x16xf32> to vector<8xf32>
    %49 = vector.shape_cast %48 : vector<8xf32> to vector<8x1xf32>
    %50 = vector.broadcast %49 : vector<8x1xf32> to vector<8x16xf32>
    %51 = arith.subf %47, %50 : vector<8x16xf32>
    %52 = math.exp %51 : vector<8x16xf32>
    %cst_26 = arith.constant dense<0.000000e+00> : vector<8xf32>
    %53 = vector.multi_reduction <add>, %52, %cst_26 [1] : vector<8x16xf32> to vector<8xf32>
    %54 = vector.shape_cast %53 : vector<8xf32> to vector<8x1xf32>
    %55 = tpu.reciprocal %54 {approx = true} : vector<8x1xf32> -> vector<8x1xf32>
    %56 = vector.broadcast %55 : vector<8x1xf32> to vector<8x16xf32>
    %57 = arith.mulf %52, %56 : vector<8x16xf32>
    %58 = arith.truncf %57 : vector<8x16xf32> to vector<8x16xbf16>
    %59 = vector.extract_strided_slice %26 {offsets = [0, 64], sizes = [16, 64], strides = [1, 1]} : vector<16x128xbf16> to vector<16x64xbf16>
    %cst_27 = arith.constant dense<0.000000e+00> : vector<8x64xf32>
    %60 = tpu.matmul %58, %59, %cst_27 {dimension_numbers = #tpu.dot_dimension_numbers<[1], [0], [0], [1], [0, 0, 1, 1], [], []>} : vector<8x16xbf16>, vector<16x64xbf16>, vector<8x64xf32> -> vector<8x64xf32>
    %61 = arith.truncf %60 : vector<8x64xf32> to vector<8x64xbf16>
    %c0_28 = arith.constant 0 : index
    %c64 = arith.constant 64 : index
    %62 = vector.load %arg12[%c0_28, %c64] : memref<8x128xbf16, #tpu.memory_space<vmem>>, vector<8x64xbf16>
    tpu.vector_store %arg12[%c0_28, %c64], %61 {strides = array<i32>} : memref<8x128xbf16, #tpu.memory_space<vmem>>, vector<8x64xbf16>,
    %c0_29 = arith.constant 0 : index
    %c0_30 = arith.constant 0 : index
    %63 = vector.load %arg12[%c0_29, %c0_30] : memref<8x128xbf16, #tpu.memory_space<vmem>>, vector<8x128xbf16>
    %c0_31 = arith.constant 0 : index
    %c0_32 = arith.constant 0 : index
    %64 = vector.load %arg7[%c0_31, %c0_32] : memref<128x128xbf16, #tpu.memory_space<vmem>>, vector<128x128xbf16>
    %cst_33 = arith.constant dense<0.000000e+00> : vector<8x128xf32>
    %65 = tpu.matmul %63, %64, %cst_33 {dimension_numbers = #tpu.dot_dimension_numbers<[1], [0], [0], [1], [0, 0, 1, 1], [], []>} : vector<8x128xbf16>, vector<128x128xbf16>, vector<8x128xf32> -> vector<8x128xf32>
    %c0_34 = arith.constant 0 : index
    %c0_35 = arith.constant 0 : index
    %66 = vector.load %arg8[%c0_34, %c0_35] : memref<1x128xf32, #tpu.memory_space<vmem>>, vector<1x128xf32>
    %67 = vector.broadcast %66 : vector<1x128xf32> to vector<8x128xf32>
    %68 = arith.addf %65, %67 : vector<8x128xf32>
    %cst_36 = arith.constant dense<0.000000e+00> : vector<8xf32>
    %69 = vector.multi_reduction <add>, %68, %cst_36 [1] : vector<8x128xf32> to vector<8xf32>
    %70 = vector.shape_cast %69 : vector<8xf32> to vector<8x1xf32>
    %cst_37 = arith.constant 1.280000e+02 : f32
    %71 = vector.broadcast %cst_37 : f32 to vector<8x1xf32>
    %72 = arith.divf %70, %71 : vector<8x1xf32>
    %73 = vector.broadcast %72 : vector<8x1xf32> to vector<8x128xf32>
    %74 = arith.subf %68, %73 : vector<8x128xf32>
    %75 = arith.mulf %74, %74 : vector<8x128xf32>
    %cst_38 = arith.constant dense<0.000000e+00> : vector<8xf32>
    %76 = vector.multi_reduction <add>, %75, %cst_38 [1] : vector<8x128xf32> to vector<8xf32>
    %77 = vector.shape_cast %76 : vector<8xf32> to vector<8x1xf32>
    %cst_39 = arith.constant 1.280000e+02 : f32
    %78 = vector.broadcast %cst_39 : f32 to vector<8x1xf32>
    %79 = arith.divf %77, %78 : vector<8x1xf32>
    %80 = vector.broadcast %72 : vector<8x1xf32> to vector<8x128xf32>
    %81 = arith.subf %68, %80 : vector<8x128xf32>
    %cst_40 = arith.constant 9.99999974E-6 : f32
    %82 = vector.broadcast %cst_40 : f32 to vector<8x1xf32>
    %83 = arith.addf %79, %82 : vector<8x1xf32>
    %84 = math.rsqrt %83 : vector<8x1xf32>
    %85 = vector.broadcast %84 : vector<8x1xf32> to vector<8x128xf32>
    %86 = arith.mulf %81, %85 : vector<8x128xf32>
    %c0_41 = arith.constant 0 : index
    %c0_42 = arith.constant 0 : index
    %87 = vector.load %arg9[%c0_41, %c0_42] : memref<1x128xf32, #tpu.memory_space<vmem>>, vector<1x128xf32>
    %88 = vector.broadcast %87 : vector<1x128xf32> to vector<8x128xf32>
    %89 = arith.mulf %86, %88 : vector<8x128xf32>
    %c0_43 = arith.constant 0 : index
    %c0_44 = arith.constant 0 : index
    %90 = vector.load %arg10[%c0_43, %c0_44] : memref<1x128xf32, #tpu.memory_space<vmem>>, vector<1x128xf32>
    %91 = vector.broadcast %90 : vector<1x128xf32> to vector<8x128xf32>
    %92 = arith.addf %89, %91 : vector<8x128xf32>
    %93 = arith.addf %1, %92 : vector<8x128xf32>
    %c0_45 = arith.constant 0 : index
    %c0_46 = arith.constant 0 : index
    %c0_47 = arith.constant 0 : index
    %94 = vector.load %arg11[%c0_45, %c0_46, %c0_47] : memref<1x8x128xf32, #tpu.memory_space<vmem>>, vector<1x8x128xf32>
    %95 = vector.shape_cast %94 : vector<1x8x128xf32> to vector<8x128xf32>
    %96 = vector.shape_cast %93 : vector<8x128xf32> to vector<1x8x128xf32>
    tpu.vector_store %arg11[%c0_45, %c0_46, %c0_47], %96 {strides = array<i32>} : memref<1x8x128xf32, #tpu.memory_space<vmem>>, vector<1x8x128xf32>,
    return
  }
  func.func @transform_0(%arg0: i32, %arg1: i32) -> (i32, i32, i32) {
    %c0_i32 = arith.constant 0 : i32
    %c0_i32_0 = arith.constant 0 : i32
    return %arg0, %arg1, %c0_i32 : i32, i32, i32
  }
  func.func @transform_1(%arg0: i32, %arg1: i32) -> (i32, i32, i32) {
    %c0_i32 = arith.constant 0 : i32
    %c0_i32_0 = arith.constant 0 : i32
    %c0_i32_1 = arith.constant 0 : i32
    return %arg0, %c0_i32, %c0_i32_0 : i32, i32, i32
  }
  func.func @transform_2(%arg0: i32, %arg1: i32) -> (i32, i32, i32) {
    %c0_i32 = arith.constant 0 : i32
    %c0_i32_0 = arith.constant 0 : i32
    %c0_i32_1 = arith.constant 0 : i32
    return %arg0, %c0_i32, %c0_i32_0 : i32, i32, i32
  }
  func.func @transform_3(%arg0: i32, %arg1: i32) -> (i32, i32) {
    %c0_i32 = arith.constant 0 : i32
    %c0_i32_0 = arith.constant 0 : i32
    %c0_i32_1 = arith.constant 0 : i32
    return %c0_i32, %c0_i32_0 : i32, i32
  }
  func.func @transform_4(%arg0: i32, %arg1: i32) -> (i32, i32) {
    %c0_i32 = arith.constant 0 : i32
    %c0_i32_0 = arith.constant 0 : i32
    %c0_i32_1 = arith.constant 0 : i32
    return %c0_i32, %c0_i32_0 : i32, i32
  }
  func.func @transform_5(%arg0: i32, %arg1: i32) -> (i32, i32) {
    %c0_i32 = arith.constant 0 : i32
    %c0_i32_0 = arith.constant 0 : i32
    %c0_i32_1 = arith.constant 0 : i32
    return %c0_i32, %c0_i32_0 : i32, i32
  }
  func.func @transform_6(%arg0: i32, %arg1: i32) -> (i32, i32) {
    %c0_i32 = arith.constant 0 : i32
    %c0_i32_0 = arith.constant 0 : i32
    %c0_i32_1 = arith.constant 0 : i32
    return %c0_i32, %c0_i32_0 : i32, i32
  }
  func.func @transform_7(%arg0: i32, %arg1: i32) -> (i32, i32) {
    %c0_i32 = arith.constant 0 : i32
    %c0_i32_0 = arith.constant 0 : i32
    %c0_i32_1 = arith.constant 0 : i32
    return %c0_i32, %c0_i32_0 : i32, i32
  }
  func.func @transform_8(%arg0: i32, %arg1: i32) -> (i32, i32) {
    %c0_i32 = arith.constant 0 : i32
    %c0_i32_0 = arith.constant 0 : i32
    %c0_i32_1 = arith.constant 0 : i32
    return %c0_i32, %c0_i32_0 : i32, i32
  }
  func.func @transform_9(%arg0: i32, %arg1: i32) -> (i32, i32, i32) {
    %c0_i32 = arith.constant 0 : i32
    %c0_i32_0 = arith.constant 0 : i32
    return %arg0, %arg1, %c0_i32 : i32, i32, i32
  }
}

</mosaic_0001>

<llo_original>
// kernel: tpu_custom_call.1
$region0: #{tpu_custom_call.1}
  #allocation0 [shape = 'u32[]', space=smem, size = 0x4, offset = 0x4, fixed_abs, tag = 'smem constant byte address 0x4 - core index']
  #allocation1 [shape = 'u32[144,128]{1,0:T(1,128)}', space=vmem, size = 0x12000, scoped, tag = 'internal scratch']
  #allocation2 [shape = 'bf16[8,128]{1,0:T(8,128)(2,1)}', space=vmem, size = 0x800, scoped, tag = 'scratch operand']
  %s0 = inlined_call_operand.hbm [shape: f32[2,8,128], index: 0, kind: input, shape index: {}]
  %s1 = inlined_call_operand.hbm [shape: f32[2,16,128], index: 1, kind: input, shape index: {}]
  %s2 = inlined_call_operand.hbm [shape: f32[2,16,128], index: 2, kind: input, shape index: {}]
  %s3 = inlined_call_operand.hbm [shape: bf16[128,384], index: 3, kind: input, shape index: {}]
  %s4 = inlined_call_operand.vmem [shape: f32[3,128], index: 4, kind: input, shape index: {}]
  %s5 = inlined_call_operand.hbm [shape: bf16[128,128], index: 5, kind: input, shape index: {}]
  %s6 = inlined_call_operand.vmem [shape: f32[1,128], index: 6, kind: input, shape index: {}]
  %s7 = inlined_call_operand.vmem [shape: f32[1,128], index: 7, kind: input, shape index: {}]
  %s8 = inlined_call_operand.vmem [shape: f32[1,128], index: 8, kind: input, shape index: {}]
  %s9 = inlined_call_operand.hbm [shape: f32[2,8,128], index: 9, kind: output, shape index: {}]
  %s10 = sld [smem:[#allocation0]]
  $region89: #{tpu_custom_call.1} parent=0
    _
  %s12 = ssub.s32 1, %s10
  %s13 = scalar_select 0, %s12, %s10
  $region1: #{tpu_custom_call.1} parent=0
    #allocation3 [shape = 'u8[8192]{0}', space=vmem, size = 0x2000, scoped, tag = 'input window, operand 0']
    #allocation4 [shape = 's32[2]{0}', space=sflag, size = 0x8, scoped, tag = 'scoped memory for tpu_custom_call.1']
    #allocation5 [shape = 's32[2]{0}', space=sflag, size = 0x8, scoped, tag = 'scoped memory for tpu_custom_call.1']
    #allocation6 [shape = 'u8[16384]{0}', space=vmem, size = 0x4000, scoped, tag = 'input window, operand 1']
    #allocation7 [shape = 's32[2]{0}', space=sflag, size = 0x8, scoped, tag = 'scoped memory for tpu_custom_call.1']
    #allocation8 [shape = 'u8[16384]{0}', space=vmem, size = 0x4000, scoped, tag = 'input window, operand 2']
    #allocation9 [shape = 'u8[98304]{0}', space=vmem, size = 0x18000, scoped, tag = 'input window, operand 3, single buffered']
    #allocation10 [shape = 's32[1]{0}', space=sflag, size = 0x4, scoped, tag = 'scoped memory for tpu_custom_call.1']
    #allocation11 [shape = 'u8[32768]{0}', space=vmem, size = 0x8000, scoped, tag = 'input window, operand 5, single buffered']
    #allocation12 [shape = 'u8[8192]{0}', space=vmem, size = 0x2000, scoped, tag = 'output window, operand 0']
    %14 = vsyncpa [#allocation4], 0
    %s15 = scalar_lea.sflag [#allocation4], 1
    %16 = vsyncpa %s15, 0
    %17 = vsyncpa [#allocation7], 0
    %s18 = scalar_lea.sflag [#allocation7], 1
    %19 = vsyncpa %s18, 0
    %20 = vsyncpa [#allocation10], 0
    %21 = vsyncpa [#allocation5], 0
    %s22 = scalar_lea.sflag [#allocation5], 1
    %23 = vsyncpa %s22, 0
    loop: start=0, step=1, limit=4
    $region2: #{tpu_custom_call.1} parent=1 // loop_pre_header
      _
    $region3: #{tpu_custom_call.1} parent=1 // loop_header
      %s25 = sphi 0, %s29
      %p26 = scmp.ge.s32.totalorder %s25, 4
      %s32 = sphi 0, %s44
      %s33 = sphi 0, %s40
      %s34 = sphi 0, %s32
      %s35 = sphi 0, %s33
      %s36 = sphi 0, %s34
      %s37 = sphi 0, %s35
      %s49 = sphi 0, %s51
      %s52 = sphi 0, %s49
      %s53 = sphi 0, %s52
      %s69 = sphi 0, %s53
      %s75 = sphi 0, %s77
      %s78 = sphi 0, %s75
      %s79 = sphi 0, %s78
      %s95 = sphi 0, %s79
      %s101 = sphi 0, %s103
      %s104 = sphi 0, %s101
      %s105 = sphi 0, %s104
      %s121 = sphi 0, %s105
      %s125 = sphi 0, %s125
      %s127 = sphi 0, %s125
      %s128 = sphi 0, %s127
      %s142 = sphi 0, %s128
      %s146 = sphi 0, %s146
      %s148 = sphi 0, %s146
      %s149 = sphi 0, %s148
      %s163 = sphi 0, %s149
      %s167 = sphi 0, %s167
      %s169 = sphi 0, %s167
      %s170 = sphi 0, %s169
      %s184 = sphi 0, %s170
      %s188 = sphi 0, %s188
      %s190 = sphi 0, %s188
      %s191 = sphi 0, %s190
      %s205 = sphi 0, %s191
      %s209 = sphi 0, %s209
      %s211 = sphi 0, %s209
      %s212 = sphi 0, %s211
      %s226 = sphi 0, %s212
      %s230 = sphi 0, %s230
      %s232 = sphi 0, %s230
      %s233 = sphi 0, %s232
      %s247 = sphi 0, %s233
      %s255 = sphi 0, %s257
      %s258 = sphi 0, %s255
      %s259 = sphi 0, %s258
      %s275 = sphi 0, %s259
    $region4: #{tpu_custom_call.1} parent=1 // loop_header_branch
      %28 = sbr.rel (%p26) target = $region8
    $region5: #{tpu_custom_call.1} parent=1 // loop_body
      %s30 = ssub.s32 %s25, 1
      %s31 = ssub.s32 %s25, 2
      %s38 = sadd.s32 1, %s33
      %p39 = scmp.ge.s32.totalorder %s38, 1
      %s40 = scalar_select %p39, 0, %s38
      %s41 = sadd.s32 1, %s32
      %s42 = scalar_select %p39, %s41, %s32
      %p43 = scmp.ge.s32.totalorder %s42, 2
      %s44 = scalar_select %p43, 0, %s42
      %s45 = ssub.s32 %s32, %s44
      %s46 = ssub.s32 %s33, %s40
      %s47 = sor.u32 %s45, %s46
      %p48 = scmp.eq.s32.totalorder %s47, 0
      %s50 = sadd.s32 %s49, 1
      %s51 = scalar_select %p48, %s49, %s50
      %p54 = pneg %p48
      %p55 = scmp.eq.s32.totalorder %s25, 1
      %p56 = por %p54, %p55
      %p57 = scmp.ne.s32.totalorder %s49, %s52
      %p58 = scmp.eq.s32.totalorder %s25, 0
      %p59 = por %p57, %p58
      %p60 = scmp.ne.s32.totalorder %s49, %s52
      %p61 = scmp.eq.s32.totalorder %s30, 1
      %p62 = por %p60, %p61
      %p63 = scmp.ne.s32.totalorder %s52, %s53
      %p64 = scmp.eq.s32.totalorder %s30, 0
      %p65 = por %p63, %p64
      %p66 = scmp.ne.s32.totalorder %s52, %s53
      %p67 = scmp.eq.s32.totalorder %s31, 1
      %p68 = por %p66, %p67
      %p70 = scmp.ne.s32.totalorder %s53, %s69
      %p71 = scmp.eq.s32.totalorder %s31, 0
      %p72 = por %p70, %p71
      %s73 = ssub.s32 %s32, %s44
      %p74 = scmp.eq.s32.totalorder %s73, 0
      %s76 = sadd.s32 %s75, 1
      %s77 = scalar_select %p74, %s75, %s76
      %p80 = pneg %p74
      %p81 = scmp.eq.s32.totalorder %s25, 1
      %p82 = por %p80, %p81
      %p83 = scmp.ne.s32.totalorder %s75, %s78
      %p84 = scmp.eq.s32.totalorder %s25, 0
      %p85 = por %p83, %p84
      %p86 = scmp.ne.s32.totalorder %s75, %s78
      %p87 = scmp.eq.s32.totalorder %s30, 1
      %p88 = por %p86, %p87
      %p89 = scmp.ne.s32.totalorder %s78, %s79
      %p90 = scmp.eq.s32.totalorder %s30, 0
      %p91 = por %p89, %p90
      %p92 = scmp.ne.s32.totalorder %s78, %s79
      %p93 = scmp.eq.s32.totalorder %s31, 1
      %p94 = por %p92, %p93
      %p96 = scmp.ne.s32.totalorder %s79, %s95
      %p97 = scmp.eq.s32.totalorder %s31, 0
      %p98 = por %p96, %p97
      %s99 = ssub.s32 %s32, %s44
      %p100 = scmp.eq.s32.totalorder %s99, 0
      %s102 = sadd.s32 %s101, 1
      %s103 = scalar_select %p100, %s101, %s102
      %p106 = pneg %p100
      %p107 = scmp.eq.s32.totalorder %s25, 1
      %p108 = por %p106, %p107
      %p109 = scmp.ne.s32.totalorder %s101, %s104
      %p110 = scmp.eq.s32.totalorder %s25, 0
      %p111 = por %p109, %p110
      %p112 = scmp.ne.s32.totalorder %s101, %s104
      %p113 = scmp.eq.s32.totalorder %s30, 1
      %p114 = por %p112, %p113
      %p115 = scmp.ne.s32.totalorder %s104, %s105
      %p116 = scmp.eq.s32.totalorder %s30, 0
      %p117 = por %p115, %p116
      %p118 = scmp.ne.s32.totalorder %s104, %s105
      %p119 = scmp.eq.s32.totalorder %s31, 1
      %p120 = por %p118, %p119
      %p122 = scmp.ne.s32.totalorder %s105, %s121
      %p123 = scmp.eq.s32.totalorder %s31, 0
      %p124 = por %p122, %p123
      %s126 = sadd.s32 %s125, 1
      %p129 = scmp.eq.s32.totalorder %s25, 1
      %p130 = scmp.ne.s32.totalorder %s125, %s127
      %p131 = scmp.eq.s32.totalorder %s25, 0
      %p132 = por %p130, %p131
      %p133 = scmp.ne.s32.totalorder %s125, %s127
      %p134 = scmp.eq.s32.totalorder %s30, 1
      %p135 = por %p133, %p134
      %p136 = scmp.ne.s32.totalorder %s127, %s128
      %p137 = scmp.eq.s32.totalorder %s30, 0
      %p138 = por %p136, %p137
      %p139 = scmp.ne.s32.totalorder %s127, %s128
      %p140 = scmp.eq.s32.totalorder %s31, 1
      %p141 = por %p139, %p140
      %p143 = scmp.ne.s32.totalorder %s128, %s142
      %p144 = scmp.eq.s32.totalorder %s31, 0
      %p145 = por %p143, %p144
      %s147 = sadd.s32 %s146, 1
      %p150 = scmp.eq.s32.totalorder %s25, 1
      %p151 = scmp.ne.s32.totalorder %s146, %s148
      %p152 = scmp.eq.s32.totalorder %s25, 0
      %p153 = por %p151, %p152
      %p154 = scmp.ne.s32.totalorder %s146, %s148
      %p155 = scmp.eq.s32.totalorder %s30, 1
      %p156 = por %p154, %p155
      %p157 = scmp.ne.s32.totalorder %s148, %s149
      %p158 = scmp.eq.s32.totalorder %s30, 0
      %p159 = por %p157, %p158
      %p160 = scmp.ne.s32.totalorder %s148, %s149
      %p161 = scmp.eq.s32.totalorder %s31, 1
      %p162 = por %p160, %p161
      %p164 = scmp.ne.s32.totalorder %s149, %s163
      %p165 = scmp.eq.s32.totalorder %s31, 0
      %p166 = por %p164, %p165
      %s168 = sadd.s32 %s167, 1
      %p171 = scmp.eq.s32.totalorder %s25, 1
      %p172 = scmp.ne.s32.totalorder %s167, %s169
      %p173 = scmp.eq.s32.totalorder %s25, 0
      %p174 = por %p172, %p173
      %p175 = scmp.ne.s32.totalorder %s167, %s169
      %p176 = scmp.eq.s32.totalorder %s30, 1
      %p177 = por %p175, %p176
      %p178 = scmp.ne.s32.totalorder %s169, %s170
      %p179 = scmp.eq.s32.totalorder %s30, 0
      %p180 = por %p178, %p179
      %p181 = scmp.ne.s32.totalorder %s169, %s170
      %p182 = scmp.eq.s32.totalorder %s31, 1
      %p183 = por %p181, %p182
      %p185 = scmp.ne.s32.totalorder %s170, %s184
      %p186 = scmp.eq.s32.totalorder %s31, 0
      %p187 = por %p185, %p186
      %s189 = sadd.s32 %s188, 1
      %p192 = scmp.eq.s32.totalorder %s25, 1
      %p193 = scmp.ne.s32.totalorder %s188, %s190
      %p194 = scmp.eq.s32.totalorder %s25, 0
      %p195 = por %p193, %p194
      %p196 = scmp.ne.s32.totalorder %s188, %s190
      %p197 = scmp.eq.s32.totalorder %s30, 1
      %p198 = por %p196, %p197
      %p199 = scmp.ne.s32.totalorder %s190, %s191
      %p200 = scmp.eq.s32.totalorder %s30, 0
      %p201 = por %p199, %p200
      %p202 = scmp.ne.s32.totalorder %s190, %s191
      %p203 = scmp.eq.s32.totalorder %s31, 1
      %p204 = por %p202, %p203
      %p206 = scmp.ne.s32.totalorder %s191, %s205
      %p207 = scmp.eq.s32.totalorder %s31, 0
      %p208 = por %p206, %p207
      %s210 = sadd.s32 %s209, 1
      %p213 = scmp.eq.s32.totalorder %s25, 1
      %p214 = scmp.ne.s32.totalorder %s209, %s211
      %p215 = scmp.eq.s32.totalorder %s25, 0
      %p216 = por %p214, %p215
      %p217 = scmp.ne.s32.totalorder %s209, %s211
      %p218 = scmp.eq.s32.totalorder %s30, 1
      %p219 = por %p217, %p218
      %p220 = scmp.ne.s32.totalorder %s211, %s212
      %p221 = scmp.eq.s32.totalorder %s30, 0
      %p222 = por %p220, %p221
      %p223 = scmp.ne.s32.totalorder %s211, %s212
      %p224 = scmp.eq.s32.totalorder %s31, 1
      %p225 = por %p223, %p224
      %p227 = scmp.ne.s32.totalorder %s212, %s226
      %p228 = scmp.eq.s32.totalorder %s31, 0
      %p229 = por %p227, %p228
      %s231 = sadd.s32 %s230, 1
      %p234 = scmp.eq.s32.totalorder %s25, 1
      %p235 = scmp.ne.s32.totalorder %s230, %s232
      %p236 = scmp.eq.s32.totalorder %s25, 0
      %p237 = por %p235, %p236
      %p238 = scmp.ne.s32.totalorder %s230, %s232
      %p239 = scmp.eq.s32.totalorder %s30, 1
      %p240 = por %p238, %p239
      %p241 = scmp.ne.s32.totalorder %s232, %s233
      %p242 = scmp.eq.s32.totalorder %s30, 0
      %p243 = por %p241, %p242
      %p244 = scmp.ne.s32.totalorder %s232, %s233
      %p245 = scmp.eq.s32.totalorder %s31, 1
      %p246 = por %p244, %p245
      %p248 = scmp.ne.s32.totalorder %s233, %s247
      %p249 = scmp.eq.s32.totalorder %s31, 0
      %p250 = por %p248, %p249
      %s251 = ssub.s32 %s32, %s44
      %s252 = ssub.s32 %s33, %s40
      %s253 = sor.u32 %s251, %s252
      %p254 = scmp.eq.s32.totalorder %s253, 0
      %s256 = sadd.s32 %s255, 1
      %s257 = scalar_select %p254, %s255, %s256
      %p260 = pneg %p254
      %p261 = scmp.eq.s32.totalorder %s25, 1
      %p262 = por %p260, %p261
      %p263 = scmp.ne.s32.totalorder %s255, %s258
      %p264 = scmp.eq.s32.totalorder %s25, 0
      %p265 = por %p263, %p264
      %p266 = scmp.ne.s32.totalorder %s255, %s258
      %p267 = scmp.eq.s32.totalorder %s30, 1
      %p268 = por %p266, %p267
      %p269 = scmp.ne.s32.totalorder %s258, %s259
      %p270 = scmp.eq.s32.totalorder %s30, 0
      %p271 = por %p269, %p270
      %p272 = scmp.ne.s32.totalorder %s258, %s259
      %p273 = scmp.eq.s32.totalorder %s31, 1
      %p274 = por %p272, %p273
      %p276 = scmp.ne.s32.totalorder %s259, %s275
      %p277 = scmp.eq.s32.totalorder %s31, 0
      %p278 = por %p276, %p277
      %p279 = scmp.le.s32.totalorder 1, %s25
      %p280 = scmp.lt.s32.totalorder %s25, 3
      %p281 = pnand %p279, %p280
      %p282 = pneg %p281
      // Predicated region
      $region9: #{tpu_custom_call.1} parent=5 // pred_check
        _
      $region10: #{tpu_custom_call.1} parent=5 // pred_check_branch
        %284 = sbr.rel (%p281) target = $region12
      $region11: #{tpu_custom_call.1} parent=5 // pred_region
        %s285 = ssub.s32 %s25, 1
        // Predicated region
        $region13: #{tpu_custom_call.1} parent=11 // pred_check
          %p286 = pneg %p138
        $region14: #{tpu_custom_call.1} parent=11 // pred_check_branch
          %288 = sbr.rel (%p286) target = $region16
        $region15: #{tpu_custom_call.1} parent=11 // pred_region
          %s290 = ssub.s32 3072, 3072
          %291 = vsyncadd [#allocation10], %s290
          %s292 = sshll.u32 [#allocation9], 4
          %s293 = int_to_ptr.vmem [resolvable:$true] %s292
          %298 = dma.hbm_to_vmem [thread:$0]  %s3, 3072, %s293, [#allocation10], 192, 192, 12
        $region16: #{tpu_custom_call.1} parent=11 // pred_fallthru
          _
        // Predicated region
        $region17: #{tpu_custom_call.1} parent=11 // pred_check
          %p299 = pneg %p159
        $region18: #{tpu_custom_call.1} parent=11 // pred_check_branch
          %301 = sbr.rel (%p299) target = $region20
        $region19: #{tpu_custom_call.1} parent=11 // pred_region
          _
        $region20: #{tpu_custom_call.1} parent=11 // pred_fallthru
          _
        // Predicated region
        $region21: #{tpu_custom_call.1} parent=11 // pred_check
          %p302 = pneg %p180
        $region22: #{tpu_custom_call.1} parent=11 // pred_check_branch
          %304 = sbr.rel (%p302) target = $region24
        $region23: #{tpu_custom_call.1} parent=11 // pred_region
          %s306 = ssub.s32 1024, 1024
          %307 = vsyncadd [#allocation10], %s306
          %s308 = sshll.u32 [#allocation11], 4
          %s309 = int_to_ptr.vmem [resolvable:$true] %s308
          %314 = dma.hbm_to_vmem [thread:$0]  %s5, 1024, %s309, [#allocation10], 64, 64, 4
        $region24: #{tpu_custom_call.1} parent=11 // pred_fallthru
          _
        // Predicated region
        $region25: #{tpu_custom_call.1} parent=11 // pred_check
          %p315 = pneg %p201
        $region26: #{tpu_custom_call.1} parent=11 // pred_check_branch
          %317 = sbr.rel (%p315) target = $region28
        $region27: #{tpu_custom_call.1} parent=11 // pred_region
          _
        $region28: #{tpu_custom_call.1} parent=11 // pred_fallthru
          _
        // Predicated region
        $region29: #{tpu_custom_call.1} parent=11 // pred_check
          %p318 = pneg %p222
        $region30: #{tpu_custom_call.1} parent=11 // pred_check_branch
          %320 = sbr.rel (%p318) target = $region32
        $region31: #{tpu_custom_call.1} parent=11 // pred_region
          _
        $region32: #{tpu_custom_call.1} parent=11 // pred_fallthru
          _
        // Predicated region
        $region33: #{tpu_custom_call.1} parent=11 // pred_check
          %p321 = pneg %p243
        $region34: #{tpu_custom_call.1} parent=11 // pred_check_branch
          %323 = sbr.rel (%p321) target = $region36
        $region35: #{tpu_custom_call.1} parent=11 // pred_region
          _
        $region36: #{tpu_custom_call.1} parent=11 // pred_fallthru
          _
      $region12: #{tpu_custom_call.1} parent=5 // pred_fallthru
        _
      %p324 = scmp.lt.s32.totalorder %s25, 2
      // Predicated region
      $region37: #{tpu_custom_call.1} parent=5 // pred_check
        %p325 = pneg %p324
      $region38: #{tpu_custom_call.1} parent=5 // pred_check_branch
        %327 = sbr.rel (%p325) target = $region40
      $region39: #{tpu_custom_call.1} parent=5 // pred_region
        // Predicated region
        $region41: #{tpu_custom_call.1} parent=39 // pred_check
          %p328 = pneg %p59
        $region42: #{tpu_custom_call.1} parent=39 // pred_check_branch
          %330 = sbr.rel (%p328) target = $region44
        $region43: #{tpu_custom_call.1} parent=39 // pred_region
          %s331 = sand.u32 %s49, 1
          %s332 = scalar_lea.sflag [#allocation4], %s331
          %s333 = sand.u32 %s49, 1
          %s334 = smul.addr %s333, 8
          %s335 = scalar_lea.vmem [#allocation3], %s334
          %s337 = ssub.s32 128, 128
          %338 = vsyncadd %s332, %s337
          %s339 = sadd.s32 %s33, %s32
          %s340 = smul.addr %s339, 128
          %s341 = scalar_lea.hbm %s0, %s340
          %s343 = sshll.u32 %s335, 4
          %s344 = int_to_ptr.vmem [resolvable:$true] %s343
          %346 = dma.hbm_to_vmem [thread:$0]  %s341, 128, %s344, %s332
        $region44: #{tpu_custom_call.1} parent=39 // pred_fallthru
          _
        // Predicated region
        $region45: #{tpu_custom_call.1} parent=39 // pred_check
          %p347 = pneg %p85
        $region46: #{tpu_custom_call.1} parent=39 // pred_check_branch
          %349 = sbr.rel (%p347) target = $region48
        $region47: #{tpu_custom_call.1} parent=39 // pred_region
          %s350 = sand.u32 %s25, 1
          %s351 = scalar_lea.sflag [#allocation7], %s350
          %s352 = sand.u32 %s75, 1
          %s353 = smul.addr %s352, 16
          %s354 = scalar_lea.vmem [#allocation6], %s353
          %s356 = ssub.s32 256, 256
          %357 = vsyncadd %s351, %s356
          %s358 = smul.addr %s32, 2
          %s359 = smul.addr %s358, 128
          %s360 = scalar_lea.hbm %s1, %s359
          %s361 = sshll.u32 %s354, 4
          %s362 = int_to_ptr.vmem [resolvable:$true] %s361
          %367 = dma.hbm_to_vmem [thread:$0]  %s360, 256, %s362, %s351, 128, 128, 8
        $region48: #{tpu_custom_call.1} parent=39 // pred_fallthru
          _
        // Predicated region
        $region49: #{tpu_custom_call.1} parent=39 // pred_check
          %p368 = pneg %p111
        $region50: #{tpu_custom_call.1} parent=39 // pred_check_branch
          %370 = sbr.rel (%p368) target = $region52
        $region51: #{tpu_custom_call.1} parent=39 // pred_region
          %s371 = sand.u32 %s25, 1
          %s372 = scalar_lea.sflag [#allocation7], %s371
          %s373 = sand.u32 %s101, 1
          %s374 = smul.addr %s373, 16
          %s375 = scalar_lea.vmem [#allocation8], %s374
          %s377 = ssub.s32 256, 256
          %378 = vsyncadd %s372, %s377
          %s379 = smul.addr %s32, 2
          %s380 = smul.addr %s379, 128
          %s381 = scalar_lea.hbm %s2, %s380
          %s382 = sshll.u32 %s375, 4
          %s383 = int_to_ptr.vmem [resolvable:$true] %s382
          %388 = dma.hbm_to_vmem [thread:$0]  %s381, 256, %s383, %s372, 128, 128, 8
        $region52: #{tpu_custom_call.1} parent=39 // pred_fallthru
          _
      $region40: #{tpu_custom_call.1} parent=5 // pred_fallthru
        _
      %p389 = scmp.le.s32.totalorder 1, %s25
      %p390 = scmp.lt.s32.totalorder %s25, 3
      %p391 = pnand %p389, %p390
      %p392 = pneg %p391
      // Predicated region
      $region53: #{tpu_custom_call.1} parent=5 // pred_check
        _
      $region54: #{tpu_custom_call.1} parent=5 // pred_check_branch
        %394 = sbr.rel (%p391) target = $region56
      $region55: #{tpu_custom_call.1} parent=5 // pred_region
        %s395 = ssub.s32 %s25, 1
        %s396 = sand.u32 %s52, 1
        %s397 = scalar_lea.sflag [#allocation4], %s396
        %s398 = sand.u32 %s52, 1
        %s399 = smul.addr %s398, 8
        %s400 = scalar_lea.vmem [#allocation3], %s399
        // Predicated region
        $region57: #{tpu_custom_call.1} parent=55 // pred_check
          %p401 = pneg %p65
        $region58: #{tpu_custom_call.1} parent=55 // pred_check_branch
          %403 = sbr.rel (%p401) target = $region60
        $region59: #{tpu_custom_call.1} parent=55 // pred_region
          %404 = dma.done %s397, 128
        $region60: #{tpu_custom_call.1} parent=55 // pred_fallthru
          _
        %s405 = sand.u32 %s30, 1
        %s406 = scalar_lea.sflag [#allocation7], %s405
        %s407 = sand.u32 %s78, 1
        %s408 = smul.addr %s407, 16
        %s409 = scalar_lea.vmem [#allocation6], %s408
        // Predicated region
        $region61: #{tpu_custom_call.1} parent=55 // pred_check
          %p410 = pneg %p91
        $region62: #{tpu_custom_call.1} parent=55 // pred_check_branch
          %412 = sbr.rel (%p410) target = $region64
        $region63: #{tpu_custom_call.1} parent=55 // pred_region
          %413 = dma.done %s406, 256
        $region64: #{tpu_custom_call.1} parent=55 // pred_fallthru
          _
        %s414 = sand.u32 %s30, 1
        %s415 = scalar_lea.sflag [#allocation7], %s414
        %s416 = sand.u32 %s104, 1
        %s417 = smul.addr %s416, 16
        %s418 = scalar_lea.vmem [#allocation8], %s417
        // Predicated region
        $region65: #{tpu_custom_call.1} parent=55 // pred_check
          %p419 = pneg %p117
        $region66: #{tpu_custom_call.1} parent=55 // pred_check_branch
          %421 = sbr.rel (%p419) target = $region68
        $region67: #{tpu_custom_call.1} parent=55 // pred_region
          %422 = dma.done %s415, 256
        $region68: #{tpu_custom_call.1} parent=55 // pred_fallthru
          _
        // Predicated region
        $region69: #{tpu_custom_call.1} parent=55 // pred_check
          %p423 = pneg %p138
        $region70: #{tpu_custom_call.1} parent=55 // pred_check_branch
          %425 = sbr.rel (%p423) target = $region72
        $region71: #{tpu_custom_call.1} parent=55 // pred_region
          %426 = dma.done [#allocation10], 3072
        $region72: #{tpu_custom_call.1} parent=55 // pred_fallthru
          _
        // Predicated region
        $region73: #{tpu_custom_call.1} parent=55 // pred_check
          %p427 = pneg %p180
        $region74: #{tpu_custom_call.1} parent=55 // pred_check_branch
          %429 = sbr.rel (%p427) target = $region76
        $region75: #{tpu_custom_call.1} parent=55 // pred_region
          %430 = dma.done [#allocation10], 1024
        $region76: #{tpu_custom_call.1} parent=55 // pred_fallthru
          _
        %s431 = sand.u32 %s52, 1
        %s432 = scalar_lea.sflag [#allocation4], %s431
        %s433 = sand.u32 %s52, 1
        %s434 = smul.addr %s433, 8
        %s435 = scalar_lea.vmem [#allocation3], %s434
        %p436 = pneg %p65
        %p437 = pneg %p62
        %s438 = sand.u32 %s30, 1
        %s439 = scalar_lea.sflag [#allocation7], %s438
        %s440 = sand.u32 %s78, 1
        %s441 = smul.addr %s440, 16
        %s442 = scalar_lea.vmem [#allocation6], %s441
        %p443 = pneg %p91
        %p444 = pneg %p88
        %s445 = sand.u32 %s30, 1
        %s446 = scalar_lea.sflag [#allocation7], %s445
        %s447 = sand.u32 %s104, 1
        %s448 = smul.addr %s447, 16
        %s449 = scalar_lea.vmem [#allocation8], %s448
        %p450 = pneg %p117
        %p451 = pneg %p114
        %p452 = pneg %p138
        %p453 = pneg %p135
        %p454 = pneg %p159
        %p455 = pneg %p156
        %p456 = pneg %p180
        %p457 = pneg %p177
        %p458 = pneg %p201
        %p459 = pneg %p198
        %p460 = pneg %p222
        %p461 = pneg %p219
        %p462 = pneg %p243
        %p463 = pneg %p240
        %p464 = pneg %p271
        %p465 = pneg %p268
        %s466 = sand.u32 %s258, 1
        %s467 = scalar_lea.sflag [#allocation5], %s466
        %s468 = sand.u32 %s258, 1
        %s469 = smul.addr %s468, 8
        %s470 = scalar_lea.vmem [#allocation12], %s469
        %v472 = vld [vmem:[%s400] sm:$0xff]
        %v473 = vpack.c.bf16 %v472, %v472
        %v474 = vld [vmem:[%s409] sm:$0xff]
        %v475 = vld [vmem:[%s409 + $0x8] sm:$0xff]
        %v476 = vpack.c.bf16 %v475, %v474
        %v477 = vld [vmem:[%s418] sm:$0xff]
        %v478 = vld [vmem:[%s418 + $0x8] sm:$0xff]
        %v479 = vpack.c.bf16 %v478, %v477
        %v480 = vld [vmem:[#allocation9] sm:$0xf]
        %v481 = vld [vmem:[#allocation9 + $0xc] sm:$0xf]
        %v482 = vld [vmem:[#allocation9 + $0x18] sm:$0xf]
        %v483 = vld [vmem:[#allocation9 + $0x24] sm:$0xf]
        %v484 = vld [vmem:[#allocation9 + $0x30] sm:$0xf]
        %v485 = vld [vmem:[#allocation9 + $0x3c] sm:$0xf]
        %v486 = vld [vmem:[#allocation9 + $0x48] sm:$0xf]
        %v487 = vld [vmem:[#allocation9 + $0x54] sm:$0xf]
        %v488 = vld [vmem:[#allocation9 + $0x60] sm:$0xf]
        %v489 = vld [vmem:[#allocation9 + $0x6c] sm:$0xf]
        %v490 = vld [vmem:[#allocation9 + $0x78] sm:$0xf]
        %v491 = vld [vmem:[#allocation9 + $0x84] sm:$0xf]
        %v492 = vld [vmem:[#allocation9 + $0x90] sm:$0xf]
        %v493 = vld [vmem:[#allocation9 + $0x9c] sm:$0xf]
        %v494 = vld [vmem:[#allocation9 + $0xa8] sm:$0xf]
        %v495 = vld [vmem:[#allocation9 + $0xb4] sm:$0xf]
        %v496 = vld [vmem:[%s4] sm:$0x1]
        %v497 = vlaneseq
        %v498 = vshrl.u32 %v497, 7
        %v499 = vsub.s32 0, %v498
        %v500 = vrot.slane %v496, %v499
        %v517 = vunpack.c.l.b16 %v480
        %v518 = vunpack.c.l.b16 %v481
        %v519 = vunpack.c.l.b16 %v482
        %v520 = vunpack.c.l.b16 %v483
        %v521 = vunpack.c.l.b16 %v484
        %v522 = vunpack.c.l.b16 %v485
        %v523 = vunpack.c.l.b16 %v486
        %v524 = vunpack.c.l.b16 %v487
        %v525 = vunpack.c.l.b16 %v488
        %v526 = vunpack.c.l.b16 %v489
        %v527 = vunpack.c.l.b16 %v490
        %v528 = vunpack.c.l.b16 %v491
        %v529 = vunpack.c.l.b16 %v492
        %v530 = vunpack.c.l.b16 %v493
        %v531 = vunpack.c.l.b16 %v494
        %v532 = vunpack.c.l.b16 %v495
        %v533 = vpack.c.b16 %v518, %v517
        %v534 = vpack.c.b16 %v520, %v519
        %v535 = vpack.c.b16 %v522, %v521
        %v536 = vpack.c.b16 %v524, %v523
        %v537 = vpack.c.b16 %v526, %v525
        %v538 = vpack.c.b16 %v528, %v527
        %v539 = vpack.c.b16 %v530, %v529
        %v540 = vpack.c.b16 %v532, %v531
        %549 = vmatprep.subr.bf16.mxu0 0
        %550 = vmatpush1.bf16.msra.mxu0 %v533
        %551 = vmatprep.subr.bf16.mxu0 0
        %552 = vmatpush1.bf16.msra.mxu0 %v534
        %553 = vmatprep.subr.bf16.mxu0 0
        %554 = vmatpush1.bf16.msra.mxu0 %v535
        %555 = vmatprep.subr.bf16.mxu0 0
        %556 = vmatpush1.bf16.msra.mxu0 %v536
        %557 = vmatprep.subr.bf16.mxu0 0
        %558 = vmatpush1.bf16.msra.mxu0 %v537
        %559 = vmatprep.subr.bf16.mxu0 0
        %560 = vmatpush1.bf16.msra.mxu0 %v538
        %561 = vmatprep.subr.bf16.mxu0 0
        %562 = vmatpush1.bf16.msra.mxu0 %v539
        %563 = vmatprep.subr.bf16.mxu0 0
        %564 = vmatpush1.bf16.msra.mxu0 %v540
        %565 = vmatprep.subr.bf16.mxu0 0
        %566 = vmatpush1.bf16.msra.mxu0 0
        %567 = vmatprep.subr.bf16.mxu0 0
        %568 = vmatpush1.bf16.msra.mxu0 0
        %569 = vmatprep.subr.bf16.mxu0 0
        %570 = vmatpush1.bf16.msra.mxu0 0
        %571 = vmatprep.subr.bf16.mxu0 0
        %572 = vmatpush1.bf16.msra.mxu0 0
        %573 = vmatprep.subr.bf16.mxu0 0
        %574 = vmatpush1.bf16.msra.mxu0 0
        %575 = vmatprep.subr.bf16.mxu0 0
        %576 = vmatpush1.bf16.msra.mxu0 0
        %577 = vmatprep.subr.bf16.mxu0 0
        %578 = vmatpush1.bf16.msra.mxu0 0
        %579 = vmatprep.subr.bf16.mxu0 0
        %580 = vmatpush1.bf16.msra.mxu0 0
        %581 = vmatprep.mubr.bf16.mxu0 0
        %582 = vmatmul.mubr.bf16.gmra.mrb[0].mxu0 %v473
        %v583 = vpop.f32.mrb[0].mxu0
        %v584 = vadd.f32 %v500, %v583
        %v585 = vpop.f32.mrb[0].mxu0
        %v586 = vpop.f32.mrb[0].mxu0
        %v587 = vpop.f32.mrb[0].mxu0
        %588 = vdwg.mxu0
        %v589 = vld [vmem:[#allocation9 + $0x4] sm:$0xf]
        %v590 = vld [vmem:[#allocation9 + $0x10] sm:$0xf]
        %v591 = vld [vmem:[#allocation9 + $0x1c] sm:$0xf]
        %v592 = vld [vmem:[#allocation9 + $0x28] sm:$0xf]
        %v593 = vld [vmem:[#allocation9 + $0x34] sm:$0xf]
        %v594 = vld [vmem:[#allocation9 + $0x40] sm:$0xf]
        %v595 = vld [vmem:[#allocation9 + $0x4c] sm:$0xf]
        %v596 = vld [vmem:[#allocation9 + $0x58] sm:$0xf]
        %v597 = vld [vmem:[#allocation9 + $0x64] sm:$0xf]
        %v598 = vld [vmem:[#allocation9 + $0x70] sm:$0xf]
        %v599 = vld [vmem:[#allocation9 + $0x7c] sm:$0xf]
        %v600 = vld [vmem:[#allocation9 + $0x88] sm:$0xf]
        %v601 = vld [vmem:[#allocation9 + $0x94] sm:$0xf]
        %v602 = vld [vmem:[#allocation9 + $0xa0] sm:$0xf]
        %v603 = vld [vmem:[#allocation9 + $0xac] sm:$0xf]
        %v604 = vld [vmem:[#allocation9 + $0xb8] sm:$0xf]
        %v605 = vld [vmem:[%s4 + $0x1] sm:$0x1]
        %v606 = vlaneseq
        %v607 = vshrl.u32 %v606, 7
        %v608 = vsub.s32 0, %v607
        %v609 = vrot.slane %v605, %v608
        %v626 = vunpack.c.l.b16 %v589
        %v627 = vunpack.c.l.b16 %v590
        %v628 = vunpack.c.l.b16 %v591
        %v629 = vunpack.c.l.b16 %v592
        %v630 = vunpack.c.l.b16 %v593
        %v631 = vunpack.c.l.b16 %v594
        %v632 = vunpack.c.l.b16 %v595
        %v633 = vunpack.c.l.b16 %v596
        %v634 = vunpack.c.l.b16 %v597
        %v635 = vunpack.c.l.b16 %v598
        %v636 = vunpack.c.l.b16 %v599
        %v637 = vunpack.c.l.b16 %v600
        %v638 = vunpack.c.l.b16 %v601
        %v639 = vunpack.c.l.b16 %v602
        %v640 = vunpack.c.l.b16 %v603
        %v641 = vunpack.c.l.b16 %v604
        %v642 = vpack.c.b16 %v627, %v626
        %v643 = vpack.c.b16 %v629, %v628
        %v644 = vpack.c.b16 %v631, %v630
        %v645 = vpack.c.b16 %v633, %v632
        %v646 = vpack.c.b16 %v635, %v634
        %v647 = vpack.c.b16 %v637, %v636
        %v648 = vpack.c.b16 %v639, %v638
        %v649 = vpack.c.b16 %v641, %v640
        %658 = vmatprep.subr.bf16.mxu0 0
        %659 = vmatpush1.bf16.msra.mxu0 %v642
        %660 = vmatprep.subr.bf16.mxu0 0
        %661 = vmatpush1.bf16.msra.mxu0 %v643
        %662 = vmatprep.subr.bf16.mxu0 0
        %663 = vmatpush1.bf16.msra.mxu0 %v644
        %664 = vmatprep.subr.bf16.mxu0 0
        %665 = vmatpush1.bf16.msra.mxu0 %v645
        %666 = vmatprep.subr.bf16.mxu0 0
        %667 = vmatpush1.bf16.msra.mxu0 %v646
        %668 = vmatprep.subr.bf16.mxu0 0
        %669 = vmatpush1.bf16.msra.mxu0 %v647
        %670 = vmatprep.subr.bf16.mxu0 0
        %671 = vmatpush1.bf16.msra.mxu0 %v648
        %672 = vmatprep.subr.bf16.mxu0 0
        %673 = vmatpush1.bf16.msra.mxu0 %v649
        %674 = vmatprep.subr.bf16.mxu0 0
        %675 = vmatpush1.bf16.msra.mxu0 0
        %676 = vmatprep.subr.bf16.mxu0 0
        %677 = vmatpush1.bf16.msra.mxu0 0
        %678 = vmatprep.subr.bf16.mxu0 0
        %679 = vmatpush1.bf16.msra.mxu0 0
        %680 = vmatprep.subr.bf16.mxu0 0
        %681 = vmatpush1.bf16.msra.mxu0 0
        %682 = vmatprep.subr.bf16.mxu0 0
        %683 = vmatpush1.bf16.msra.mxu0 0
        %684 = vmatprep.subr.bf16.mxu0 0
        %685 = vmatpush1.bf16.msra.mxu0 0
        %686 = vmatprep.subr.bf16.mxu0 0
        %687 = vmatpush1.bf16.msra.mxu0 0
        %688 = vmatprep.subr.bf16.mxu0 0
        %689 = vmatpush1.bf16.msra.mxu0 0
        %690 = vmatprep.mubr.bf16.mxu0 0
        %691 = vmatmul.mubr.bf16.gmra.mrb[0].mxu0 %v476
        %v692 = vpop.f32.mrb[0].mxu0
        %v693 = vadd.f32 %v609, %v692
        %v694 = vpop.f32.mrb[0].mxu0
        %v695 = vpop.f32.mrb[0].mxu0
        %v696 = vadd.f32 %v609, %v695
        %v697 = vpop.f32.mrb[0].mxu0
        %698 = vdwg.mxu0
        %v699 = vld [vmem:[#allocation9 + $0x8] sm:$0xf]
        %v700 = vld [vmem:[#allocation9 + $0x14] sm:$0xf]
        %v701 = vld [vmem:[#allocation9 + $0x20] sm:$0xf]
        %v702 = vld [vmem:[#allocation9 + $0x2c] sm:$0xf]
        %v703 = vld [vmem:[#allocation9 + $0x38] sm:$0xf]
        %v704 = vld [vmem:[#allocation9 + $0x44] sm:$0xf]
        %v705 = vld [vmem:[#allocation9 + $0x50] sm:$0xf]
        %v706 = vld [vmem:[#allocation9 + $0x5c] sm:$0xf]
        %v707 = vld [vmem:[#allocation9 + $0x68] sm:$0xf]
        %v708 = vld [vmem:[#allocation9 + $0x74] sm:$0xf]
        %v709 = vld [vmem:[#allocation9 + $0x80] sm:$0xf]
        %v710 = vld [vmem:[#allocation9 + $0x8c] sm:$0xf]
        %v711 = vld [vmem:[#allocation9 + $0x98] sm:$0xf]
        %v712 = vld [vmem:[#allocation9 + $0xa4] sm:$0xf]
        %v713 = vld [vmem:[#allocation9 + $0xb0] sm:$0xf]
        %v714 = vld [vmem:[#allocation9 + $0xbc] sm:$0xf]
        %v715 = vld [vmem:[%s4 + $0x2] sm:$0x1]
        %v716 = vlaneseq
        %v717 = vshrl.u32 %v716, 7
        %v718 = vsub.s32 0, %v717
        %v719 = vrot.slane %v715, %v718
        %v736 = vunpack.c.l.b16 %v699
        %v737 = vunpack.c.l.b16 %v700
        %v738 = vunpack.c.l.b16 %v701
        %v739 = vunpack.c.l.b16 %v702
        %v740 = vunpack.c.l.b16 %v703
        %v741 = vunpack.c.l.b16 %v704
        %v742 = vunpack.c.l.b16 %v705
        %v743 = vunpack.c.l.b16 %v706
        %v744 = vunpack.c.l.b16 %v707
        %v745 = vunpack.c.l.b16 %v708
        %v746 = vunpack.c.l.b16 %v709
        %v747 = vunpack.c.l.b16 %v710
        %v748 = vunpack.c.l.b16 %v711
        %v749 = vunpack.c.l.b16 %v712
        %v750 = vunpack.c.l.b16 %v713
        %v751 = vunpack.c.l.b16 %v714
        %v752 = vpack.c.b16 %v737, %v736
        %v753 = vpack.c.b16 %v739, %v738
        %v754 = vpack.c.b16 %v741, %v740
        %v755 = vpack.c.b16 %v743, %v742
        %v756 = vpack.c.b16 %v745, %v744
        %v757 = vpack.c.b16 %v747, %v746
        %v758 = vpack.c.b16 %v749, %v748
        %v759 = vpack.c.b16 %v751, %v750
        %768 = vmatprep.subr.bf16.mxu0 0
        %769 = vmatpush1.bf16.msra.mxu0 %v752
        %770 = vmatprep.subr.bf16.mxu0 0
        %771 = vmatpush1.bf16.msra.mxu0 %v753
        %772 = vmatprep.subr.bf16.mxu0 0
        %773 = vmatpush1.bf16.msra.mxu0 %v754
        %774 = vmatprep.subr.bf16.mxu0 0
        %775 = vmatpush1.bf16.msra.mxu0 %v755
        %776 = vmatprep.subr.bf16.mxu0 0
        %777 = vmatpush1.bf16.msra.mxu0 %v756
        %778 = vmatprep.subr.bf16.mxu0 0
        %779 = vmatpush1.bf16.msra.mxu0 %v757
        %780 = vmatprep.subr.bf16.mxu0 0
        %781 = vmatpush1.bf16.msra.mxu0 %v758
        %782 = vmatprep.subr.bf16.mxu0 0
        %783 = vmatpush1.bf16.msra.mxu0 %v759
        %784 = vmatprep.subr.bf16.mxu0 0
        %785 = vmatpush1.bf16.msra.mxu0 0
        %786 = vmatprep.subr.bf16.mxu0 0
        %787 = vmatpush1.bf16.msra.mxu0 0
        %788 = vmatprep.subr.bf16.mxu0 0
        %789 = vmatpush1.bf16.msra.mxu0 0
        %790 = vmatprep.subr.bf16.mxu0 0
        %791 = vmatpush1.bf16.msra.mxu0 0
        %792 = vmatprep.subr.bf16.mxu0 0
        %793 = vmatpush1.bf16.msra.mxu0 0
        %794 = vmatprep.subr.bf16.mxu0 0
        %795 = vmatpush1.bf16.msra.mxu0 0
        %796 = vmatprep.subr.bf16.mxu0 0
        %797 = vmatpush1.bf16.msra.mxu0 0
        %798 = vmatprep.subr.bf16.mxu0 0
        %799 = vmatpush1.bf16.msra.mxu0 0
        %800 = vmatprep.mubr.bf16.mxu0 0
        %801 = vmatmul.mubr.bf16.gmra.mrb[0].mxu0 %v479
        %v802 = vpop.f32.mrb[0].mxu0
        %v803 = vadd.f32 %v719, %v802
        %v804 = vpop.f32.mrb[0].mxu0
        %v805 = vpop.f32.mrb[0].mxu0
        %v806 = vadd.f32 %v719, %v805
        %v807 = vpop.f32.mrb[0].mxu0
        %808 = vdwg.mxu0
        %v809 = vpack.c.bf16 %v584, %v584
        %v810 = vpack.c.bf16 %v696, %v693
        %v811 = vpack.c.bf16 %v806, %v803
        %vm812 = vcmask 523264
        %v814 = vsel %vm812, %v809, 0
        %v817 = vsel %vm812, %v810, 0
        %819 = vmatprep.subr.bf16.mxu0 0
        %820 = vmatpush1.bf16.xpose.msra.mxu0 %v817
        %821 = vmatprep.subr.bf16.mxu0 0
        %822 = vmatpush1.bf16.xpose.msra.mxu0 0
        %823 = vmatprep.subr.bf16.mxu0 0
        %824 = vmatpush1.bf16.xpose.msra.mxu0 0
        %825 = vmatprep.subr.bf16.mxu0 0
        %826 = vmatpush1.bf16.xpose.msra.mxu0 0
        %827 = vmatprep.subr.bf16.mxu0 0
        %828 = vmatpush1.bf16.xpose.msra.mxu0 0
        %829 = vmatprep.subr.bf16.mxu0 0
        %830 = vmatpush1.bf16.xpose.msra.mxu0 0
        %831 = vmatprep.subr.bf16.mxu0 0
        %832 = vmatpush1.bf16.xpose.msra.mxu0 0
        %833 = vmatprep.subr.bf16.mxu0 0
        %834 = vmatpush1.bf16.xpose.msra.mxu0 0
        %835 = vmatprep.subr.bf16.mxu0 0
        %836 = vmatpush1.bf16.xpose.msra.mxu0 0
        %837 = vmatprep.subr.bf16.mxu0 0
        %838 = vmatpush1.bf16.xpose.msra.mxu0 0
        %839 = vmatprep.subr.bf16.mxu0 0
        %840 = vmatpush1.bf16.xpose.msra.mxu0 0
        %841 = vmatprep.subr.bf16.mxu0 0
        %842 = vmatpush1.bf16.xpose.msra.mxu0 0
        %843 = vmatprep.subr.bf16.mxu0 0
        %844 = vmatpush1.bf16.xpose.msra.mxu0 0
        %845 = vmatprep.subr.bf16.mxu0 0
        %846 = vmatpush1.bf16.xpose.msra.mxu0 0
        %847 = vmatprep.subr.bf16.mxu0 0
        %848 = vmatpush1.bf16.xpose.msra.mxu0 0
        %849 = vmatprep.subr.bf16.mxu0 0
        %850 = vmatpush1.bf16.xpose.msra.mxu0 0
        %851 = vmatprep.mubr.bf16.mxu0 0
        %852 = vmatmul.mubr.bf16.gmra.mrb[0].mxu0 %v814
        %v853 = vpop.f32.mrb[0].mxu0
        %v854 = vadd.f32 0.0, %v853
        %v855 = vpop.f32.mrb[0].mxu0
        %v856 = vpop.f32.mrb[0].mxu0
        %v857 = vpop.f32.mrb[0].mxu0
        %858 = vdwg.mxu0
        %vm859 = vcmask 130048
        %v860 = vsel %vm859, %v854, -inf
        %861 = vmax.xlane.f32.xlu0 %v860
        %v862 = vpop.xlane.xlu0 %861
        %v863 = vsub.f32 %v854, %v862
        %v864 = vmul.f32 %v863, 1.442695
        %v865 = vpow.pop %v864
        %v866 = vsel %vm859, %v865, 0.0
        %867 = vadd.xlane.f32.xlu0 %v866
        %v868 = vpop.xlane.xlu0 %867
        %v869 = vrcp.pop %v868
        %v870 = vmul.f32 %v865, %v869
        %v871 = vpack.c.bf16 %v870, %v870
        %v873 = vsel %vm859, %v871, 0
        %875 = vmatprep.subr.bf16.mxu0 0
        %876 = vmatpush1.bf16.msra.mxu0 %v811
        %877 = vmatprep.subr.bf16.mxu0 0
        %878 = vmatpush1.bf16.msra.mxu0 0
        %879 = vmatprep.subr.bf16.mxu0 0
        %880 = vmatpush1.bf16.msra.mxu0 0
        %881 = vmatprep.subr.bf16.mxu0 0
        %882 = vmatpush1.bf16.msra.mxu0 0
        %883 = vmatprep.subr.bf16.mxu0 0
        %884 = vmatpush1.bf16.msra.mxu0 0
        %885 = vmatprep.subr.bf16.mxu0 0
        %886 = vmatpush1.bf16.msra.mxu0 0
        %887 = vmatprep.subr.bf16.mxu0 0
        %888 = vmatpush1.bf16.msra.mxu0 0
        %889 = vmatprep.subr.bf16.mxu0 0
        %890 = vmatpush1.bf16.msra.mxu0 0
        %891 = vmatprep.subr.bf16.mxu0 0
        %892 = vmatpush1.bf16.msra.mxu0 0
        %893 = vmatprep.subr.bf16.mxu0 0
        %894 = vmatpush1.bf16.msra.mxu0 0
        %895 = vmatprep.subr.bf16.mxu0 0
        %896 = vmatpush1.bf16.msra.mxu0 0
        %897 = vmatprep.subr.bf16.mxu0 0
        %898 = vmatpush1.bf16.msra.mxu0 0
        %899 = vmatprep.subr.bf16.mxu0 0
        %900 = vmatpush1.bf16.msra.mxu0 0
        %901 = vmatprep.subr.bf16.mxu0 0
        %902 = vmatpush1.bf16.msra.mxu0 0
        %903 = vmatprep.subr.bf16.mxu0 0
        %904 = vmatpush1.bf16.msra.mxu0 0
        %905 = vmatprep.subr.bf16.mxu0 0
        %906 = vmatpush1.bf16.msra.mxu0 0
        %907 = vmatprep.mubr.bf16.mxu0 0
        %908 = vmatmul.mubr.bf16.gmra.mrb[0].mxu0 %v873
        %v909 = vpop.f32.mrb[0].mxu0
        %v910 = vadd.f32 0.0, %v909
        %v911 = vpop.f32.mrb[0].mxu0
        %v912 = vpop.f32.mrb[0].mxu0
        %v913 = vpop.f32.mrb[0].mxu0
        %914 = vdwg.mxu0
        %v915 = vpack.c.bf16 %v910, %v910
        %vm916 = vcmask 519168
        %917 = vst.msk [vmem:[#allocation2] sm:$0xf] %vm916, %v915
        %919 = vrot.lane.b32.xlu0 %v809, 64
        %v920 = vpop.permute.xlu0 %919
        %922 = vrot.lane.b32.xlu0 %v810, 64
        %v923 = vpop.permute.xlu0 %922
        %v925 = vsel %vm812, %v920, 0
        %v928 = vsel %vm812, %v923, 0
        %930 = vmatprep.subr.bf16.mxu0 0
        %931 = vmatpush1.bf16.xpose.msra.mxu0 %v928
        %932 = vmatprep.subr.bf16.mxu0 0
        %933 = vmatpush1.bf16.xpose.msra.mxu0 0
        %934 = vmatprep.subr.bf16.mxu0 0
        %935 = vmatpush1.bf16.xpose.msra.mxu0 0
        %936 = vmatprep.subr.bf16.mxu0 0
        %937 = vmatpush1.bf16.xpose.msra.mxu0 0
        %938 = vmatprep.subr.bf16.mxu0 0
        %939 = vmatpush1.bf16.xpose.msra.mxu0 0
        %940 = vmatprep.subr.bf16.mxu0 0
        %941 = vmatpush1.bf16.xpose.msra.mxu0 0
        %942 = vmatprep.subr.bf16.mxu0 0
        %943 = vmatpush1.bf16.xpose.msra.mxu0 0
        %944 = vmatprep.subr.bf16.mxu0 0
        %945 = vmatpush1.bf16.xpose.msra.mxu0 0
        %946 = vmatprep.subr.bf16.mxu0 0
        %947 = vmatpush1.bf16.xpose.msra.mxu0 0
        %948 = vmatprep.subr.bf16.mxu0 0
        %949 = vmatpush1.bf16.xpose.msra.mxu0 0
        %950 = vmatprep.subr.bf16.mxu0 0
        %951 = vmatpush1.bf16.xpose.msra.mxu0 0
        %952 = vmatprep.subr.bf16.mxu0 0
        %953 = vmatpush1.bf16.xpose.msra.mxu0 0
        %954 = vmatprep.subr.bf16.mxu0 0
        %955 = vmatpush1.bf16.xpose.msra.mxu0 0
        %956 = vmatprep.subr.bf16.mxu0 0
        %957 = vmatpush1.bf16.xpose.msra.mxu0 0
        %958 = vmatprep.subr.bf16.mxu0 0
        %959 = vmatpush1.bf16.xpose.msra.mxu0 0
        %960 = vmatprep.subr.bf16.mxu0 0
        %961 = vmatpush1.bf16.xpose.msra.mxu0 0
        %962 = vmatprep.mubr.bf16.mxu0 0
        %963 = vmatmul.mubr.bf16.gmra.mrb[0].mxu0 %v925
        %v964 = vpop.f32.mrb[0].mxu0
        %v965 = vadd.f32 0.0, %v964
        %v966 = vpop.f32.mrb[0].mxu0
        %v967 = vpop.f32.mrb[0].mxu0
        %v968 = vpop.f32.mrb[0].mxu0
        %969 = vdwg.mxu0
        %v970 = vsel %vm859, %v965, -inf
        %971 = vmax.xlane.f32.xlu0 %v970
        %v972 = vpop.xlane.xlu0 %971
        %v973 = vsub.f32 %v965, %v972
        %v974 = vmul.f32 %v973, 1.442695
        %v975 = vpow.pop %v974
        %v976 = vsel %vm859, %v975, 0.0
        %977 = vadd.xlane.f32.xlu0 %v976
        %v978 = vpop.xlane.xlu0 %977
        %v979 = vrcp.pop %v978
        %v980 = vmul.f32 %v975, %v979
        %v981 = vpack.c.bf16 %v980, %v980
        %983 = vrot.lane.b32.xlu0 %v811, 64
        %v984 = vpop.permute.xlu0 %983
        %v987 = vsel %vm859, %v981, 0
        %989 = vmatprep.subr.bf16.mxu0 0
        %990 = vmatpush1.bf16.msra.mxu0 %v984
        %991 = vmatprep.subr.bf16.mxu0 0
        %992 = vmatpush1.bf16.msra.mxu0 0
        %993 = vmatprep.subr.bf16.mxu0 0
        %994 = vmatpush1.bf16.msra.mxu0 0
        %995 = vmatprep.subr.bf16.mxu0 0
        %996 = vmatpush1.bf16.msra.mxu0 0
        %997 = vmatprep.subr.bf16.mxu0 0
        %998 = vmatpush1.bf16.msra.mxu0 0
        %999 = vmatprep.subr.bf16.mxu0 0
        %1000 = vmatpush1.bf16.msra.mxu0 0
        %1001 = vmatprep.subr.bf16.mxu0 0
        %1002 = vmatpush1.bf16.msra.mxu0 0
        %1003 = vmatprep.subr.bf16.mxu0 0
        %1004 = vmatpush1.bf16.msra.mxu0 0
        %1005 = vmatprep.subr.bf16.mxu0 0
        %1006 = vmatpush1.bf16.msra.mxu0 0
        %1007 = vmatprep.subr.bf16.mxu0 0
        %1008 = vmatpush1.bf16.msra.mxu0 0
        %1009 = vmatprep.subr.bf16.mxu0 0
        %1010 = vmatpush1.bf16.msra.mxu0 0
        %1011 = vmatprep.subr.bf16.mxu0 0
        %1012 = vmatpush1.bf16.msra.mxu0 0
        %1013 = vmatprep.subr.bf16.mxu0 0
        %1014 = vmatpush1.bf16.msra.mxu0 0
        %1015 = vmatprep.subr.bf16.mxu0 0
        %1016 = vmatpush1.bf16.msra.mxu0 0
        %1017 = vmatprep.subr.bf16.mxu0 0
        %1018 = vmatpush1.bf16.msra.mxu0 0
        %1019 = vmatprep.subr.bf16.mxu0 0
        %1020 = vmatpush1.bf16.msra.mxu0 0
        %1021 = vmatprep.mubr.bf16.mxu0 0
        %1022 = vmatmul.mubr.bf16.gmra.mrb[0].mxu0 %v987
        %v1023 = vpop.f32.mrb[0].mxu0
        %v1024 = vadd.f32 0.0, %v1023
        %v1025 = vpop.f32.mrb[0].mxu0
        %v1026 = vpop.f32.mrb[0].mxu0
        %v1027 = vpop.f32.mrb[0].mxu0
        %1028 = vdwg.mxu0
        %v1029 = vpack.c.bf16 %v1024, %v1024
        %v1031 = vunpack.c.l.b16 %v1029
        %v1032 = vpack.c.b16 %v1031, %v1031
        %1033 = vrot.lane.b32.xlu0 %v1032, 64
        %v1034 = vpop.permute.xlu0 %1033
        %vm1036 = vcmask 1043968
        %1037 = vst.msk [vmem:[#allocation2] sm:$0xf] %vm1036, %v1034
        %v1038 = vld [vmem:[#allocation2] sm:$0xf]
        %v1039 = vld [vmem:[#allocation11] sm:$0xf]
        %v1040 = vld [vmem:[#allocation11 + $0x4] sm:$0xf]
        %v1041 = vld [vmem:[#allocation11 + $0x8] sm:$0xf]
        %v1042 = vld [vmem:[#allocation11 + $0xc] sm:$0xf]
        %v1043 = vld [vmem:[#allocation11 + $0x10] sm:$0xf]
        %v1044 = vld [vmem:[#allocation11 + $0x14] sm:$0xf]
        %v1045 = vld [vmem:[#allocation11 + $0x18] sm:$0xf]
        %v1046 = vld [vmem:[#allocation11 + $0x1c] sm:$0xf]
        %v1047 = vld [vmem:[#allocation11 + $0x20] sm:$0xf]
        %v1048 = vld [vmem:[#allocation11 + $0x24] sm:$0xf]
        %v1049 = vld [vmem:[#allocation11 + $0x28] sm:$0xf]
        %v1050 = vld [vmem:[#allocation11 + $0x2c] sm:$0xf]
        %v1051 = vld [vmem:[#allocation11 + $0x30] sm:$0xf]
        %v1052 = vld [vmem:[#allocation11 + $0x34] sm:$0xf]
        %v1053 = vld [vmem:[#allocation11 + $0x38] sm:$0xf]
        %v1054 = vld [vmem:[#allocation11 + $0x3c] sm:$0xf]
        %v1055 = vld [vmem:[%s6] sm:$0x1]
        %v1057 = vlaneseq
        %v1058 = vshrl.u32 %v1057, 7
        %v1059 = vsub.s32 0, %v1058
        %v1060 = vrot.slane %v1055, %v1059
        %v1078 = vunpack.c.l.b16 %v1039
        %v1079 = vunpack.c.l.b16 %v1040
        %v1080 = vunpack.c.l.b16 %v1041
        %v1081 = vunpack.c.l.b16 %v1042
        %v1082 = vunpack.c.l.b16 %v1043
        %v1083 = vunpack.c.l.b16 %v1044
        %v1084 = vunpack.c.l.b16 %v1045
        %v1085 = vunpack.c.l.b16 %v1046
        %v1086 = vunpack.c.l.b16 %v1047
        %v1087 = vunpack.c.l.b16 %v1048
        %v1088 = vunpack.c.l.b16 %v1049
        %v1089 = vunpack.c.l.b16 %v1050
        %v1090 = vunpack.c.l.b16 %v1051
        %v1091 = vunpack.c.l.b16 %v1052
        %v1092 = vunpack.c.l.b16 %v1053
        %v1093 = vunpack.c.l.b16 %v1054
        %v1094 = vpack.c.b16 %v1079, %v1078
        %v1095 = vpack.c.b16 %v1081, %v1080
        %v1096 = vpack.c.b16 %v1083, %v1082
        %v1097 = vpack.c.b16 %v1085, %v1084
        %v1098 = vpack.c.b16 %v1087, %v1086
        %v1099 = vpack.c.b16 %v1089, %v1088
        %v1100 = vpack.c.b16 %v1091, %v1090
        %v1101 = vpack.c.b16 %v1093, %v1092
        %1110 = vmatprep.subr.bf16.mxu0 0
        %1111 = vmatpush1.bf16.msra.mxu0 %v1094
        %1112 = vmatprep.subr.bf16.mxu0 0
        %1113 = vmatpush1.bf16.msra.mxu0 %v1095
        %1114 = vmatprep.subr.bf16.mxu0 0
        %1115 = vmatpush1.bf16.msra.mxu0 %v1096
        %1116 = vmatprep.subr.bf16.mxu0 0
        %1117 = vmatpush1.bf16.msra.mxu0 %v1097
        %1118 = vmatprep.subr.bf16.mxu0 0
        %1119 = vmatpush1.bf16.msra.mxu0 %v1098
        %1120 = vmatprep.subr.bf16.mxu0 0
        %1121 = vmatpush1.bf16.msra.mxu0 %v1099
        %1122 = vmatprep.subr.bf16.mxu0 0
        %1123 = vmatpush1.bf16.msra.mxu0 %v1100
        %1124 = vmatprep.subr.bf16.mxu0 0
        %1125 = vmatpush1.bf16.msra.mxu0 %v1101
        %1126 = vmatprep.subr.bf16.mxu0 0
        %1127 = vmatpush1.bf16.msra.mxu0 0
        %1128 = vmatprep.subr.bf16.mxu0 0
        %1129 = vmatpush1.bf16.msra.mxu0 0
        %1130 = vmatprep.subr.bf16.mxu0 0
        %1131 = vmatpush1.bf16.msra.mxu0 0
        %1132 = vmatprep.subr.bf16.mxu0 0
        %1133 = vmatpush1.bf16.msra.mxu0 0
        %1134 = vmatprep.subr.bf16.mxu0 0
        %1135 = vmatpush1.bf16.msra.mxu0 0
        %1136 = vmatprep.subr.bf16.mxu0 0
        %1137 = vmatpush1.bf16.msra.mxu0 0
        %1138 = vmatprep.subr.bf16.mxu0 0
        %1139 = vmatpush1.bf16.msra.mxu0 0
        %1140 = vmatprep.subr.bf16.mxu0 0
        %1141 = vmatpush1.bf16.msra.mxu0 0
        %1142 = vmatprep.mubr.bf16.mxu0 0
        %1143 = vmatmul.mubr.bf16.gmra.mrb[0].mxu0 %v1038
        %v1144 = vpop.f32.mrb[0].mxu0
        %v1145 = vadd.f32 %v1060, %v1144
        %v1146 = vpop.f32.mrb[0].mxu0
        %v1147 = vpop.f32.mrb[0].mxu0
        %v1148 = vpop.f32.mrb[0].mxu0
        %1149 = vdwg.mxu0
        %1150 = vadd.xlane.f32.xlu0 %v1145
        %v1151 = vpop.xlane.xlu0 %1150
        %v1152 = vrcp.pop 128.0
        %v1153 = vmul.f32 %v1151, %v1152
        %v1154 = vsub.f32 %v1145, %v1153
        %v1155 = vmul.f32 %v1154, %v1154
        %1156 = vadd.xlane.f32.xlu0 %v1155
        %v1157 = vpop.xlane.xlu0 %1156
        %v1158 = vmul.f32 %v1157, %v1152
        %v1159 = vadd.f32 %v1158, 1e-05
        %v1160 = vrsqrt.pop %v1159
        %v1161 = vmul.f32 %v1154, %v1160
        %v1162 = vld [vmem:[%s7] sm:$0x1]
        %v1164 = vlaneseq
        %v1165 = vshrl.u32 %v1164, 7
        %v1166 = vsub.s32 0, %v1165
        %v1167 = vrot.slane %v1162, %v1166
        %v1169 = vmul.f32 %v1161, %v1167
        %v1170 = vld [vmem:[%s8] sm:$0x1]
        %v1172 = vlaneseq
        %v1173 = vshrl.u32 %v1172, 7
        %v1174 = vsub.s32 0, %v1173
        %v1175 = vrot.slane %v1170, %v1174
        %v1177 = vadd.f32 %v1169, %v1175
        %v1178 = vadd.f32 %v472, %v1177
        %1179 = vst [vmem:[%s470] sm:$0xff] %v1178
        %s1180 = sand.u32 %s258, 1
        %s1181 = scalar_lea.sflag [#allocation5], %s1180
        %s1182 = sand.u32 %s258, 1
        %s1183 = smul.addr %s1182, 8
        %s1184 = scalar_lea.vmem [#allocation12], %s1183
        // Predicated region
        $region77: #{tpu_custom_call.1} parent=55 // pred_check
          %p1185 = pneg %p268
        $region78: #{tpu_custom_call.1} parent=55 // pred_check_branch
          %1187 = sbr.rel (%p1185) target = $region80
        $region79: #{tpu_custom_call.1} parent=55 // pred_region
          %s1189 = ssub.s32 128, 128
          %1190 = vsyncadd %s1181, %s1189
          %s1191 = sadd.s32 %s35, %s34
          %s1192 = smul.addr %s1191, 128
          %s1193 = scalar_lea.hbm %s9, %s1192
          %s1195 = sshll.u32 %s1184, 4
          %s1196 = int_to_ptr.vmem [resolvable:$true] %s1195
          %1198 = dma.vmem_to_hbm [thread:$0]  %s1196, 128, %s1193, %s1181
        $region80: #{tpu_custom_call.1} parent=55 // pred_fallthru
          _
      $region56: #{tpu_custom_call.1} parent=5 // pred_fallthru
        _
      %p1199 = scmp.le.s32.totalorder 2, %s25
      // Predicated region
      $region81: #{tpu_custom_call.1} parent=5 // pred_check
        %p1200 = pneg %p1199
      $region82: #{tpu_custom_call.1} parent=5 // pred_check_branch
        %1202 = sbr.rel (%p1200) target = $region84
      $region83: #{tpu_custom_call.1} parent=5 // pred_region
        %s1203 = ssub.s32 %s25, 2
        // Predicated region
        $region85: #{tpu_custom_call.1} parent=83 // pred_check
          %p1204 = pneg %p274
        $region86: #{tpu_custom_call.1} parent=83 // pred_check_branch
          %1206 = sbr.rel (%p1204) target = $region88
        $region87: #{tpu_custom_call.1} parent=83 // pred_region
          %s1207 = sand.u32 %s259, 1
          %s1208 = scalar_lea.sflag [#allocation5], %s1207
          %s1209 = sand.u32 %s259, 1
          %s1210 = smul.addr %s1209, 8
          %s1211 = scalar_lea.vmem [#allocation12], %s1210
          %1212 = dma.done %s1208, 128
        $region88: #{tpu_custom_call.1} parent=83 // pred_fallthru
          _
      $region84: #{tpu_custom_call.1} parent=5 // pred_fallthru
        _
    $region6: #{tpu_custom_call.1} parent=1 // loop_footer
      %s29 = sadd.s32 1, %s25
    $region7: #{tpu_custom_call.1} parent=1 // loop_footer_branch
      %24 = sbr.rel target = $region3
    $region8: #{tpu_custom_call.1} parent=1 // loop_exit
      _
    %1213 = vsyncpa [#allocation4], 1
    %s1214 = scalar_lea.sflag [#allocation4], 1
    %1215 = vsyncpa %s1214, 1
    %1216 = vsyncpa [#allocation7], 1
    %s1217 = scalar_lea.sflag [#allocation7], 1
    %1218 = vsyncpa %s1217, 1
    %1219 = vsyncpa [#allocation10], 1
    %1220 = vsyncpa [#allocation5], 1
    %s1221 = scalar_lea.sflag [#allocation5], 1
    %1222 = vsyncpa %s1221, 1

// kernel: tpu_custom_call.1
$region0: #{tpu_custom_call.1}
  #allocation0 [shape = 'u32[]', space=smem, size = 0x4, offset = 0x4, fixed_abs, tag = 'smem constant byte address 0x4 - core index']
  #allocation1 [shape = 'u32[144,128]{1,0:T(1,128)}', space=vmem, size = 0x12000, scoped, tag = 'internal scratch']
  #allocation2 [shape = 'bf16[8,128]{1,0:T(8,128)(2,1)}', space=vmem, size = 0x800, scoped, tag = 'scratch operand']
  %s0 = inlined_call_operand.hbm [shape: f32[2,8,128], index: 0, kind: input, shape index: {}]
  %s1 = inlined_call_operand.hbm [shape: f32[2,16,128], index: 1, kind: input, shape index: {}]
  %s2 = inlined_call_operand.hbm [shape: f32[2,16,128], index: 2, kind: input, shape index: {}]
  %s3 = inlined_call_operand.hbm [shape: bf16[128,384], index: 3, kind: input, shape index: {}]
  %s4 = inlined_call_operand.vmem [shape: f32[3,128], index: 4, kind: input, shape index: {}]
  %s5 = inlined_call_operand.hbm [shape: bf16[128,128], index: 5, kind: input, shape index: {}]
  %s6 = inlined_call_operand.vmem [shape: f32[1,128], index: 6, kind: input, shape index: {}]
  %s7 = inlined_call_operand.vmem [shape: f32[1,128], index: 7, kind: input, shape index: {}]
  %s8 = inlined_call_operand.vmem [shape: f32[1,128], index: 8, kind: input, shape index: {}]
  %s9 = inlined_call_operand.hbm [shape: f32[2,8,128], index: 9, kind: output, shape index: {}]
  %s10 = sld [smem:[#allocation0]]
  $region89: #{tpu_custom_call.1} parent=0
    _
  %s12 = ssub.s32 1, %s10
  %s13 = scalar_select 0, %s12, %s10
  $region1: #{tpu_custom_call.1} parent=0
    #allocation3 [shape = 'u8[8192]{0}', space=vmem, size = 0x2000, scoped, tag = 'input window, operand 0']
    #allocation4 [shape = 's32[2]{0}', space=sflag, size = 0x8, scoped, tag = 'scoped memory for tpu_custom_call.1']
    #allocation5 [shape = 's32[2]{0}', space=sflag, size = 0x8, scoped, tag = 'scoped memory for tpu_custom_call.1']
    #allocation6 [shape = 'u8[16384]{0}', space=vmem, size = 0x4000, scoped, tag = 'input window, operand 1']
    #allocation7 [shape = 's32[2]{0}', space=sflag, size = 0x8, scoped, tag = 'scoped memory for tpu_custom_call.1']
    #allocation8 [shape = 'u8[16384]{0}', space=vmem, size = 0x4000, scoped, tag = 'input window, operand 2']
    #allocation9 [shape = 'u8[98304]{0}', space=vmem, size = 0x18000, scoped, tag = 'input window, operand 3, single buffered']
    #allocation10 [shape = 's32[1]{0}', space=sflag, size = 0x4, scoped, tag = 'scoped memory for tpu_custom_call.1']
    #allocation11 [shape = 'u8[32768]{0}', space=vmem, size = 0x8000, scoped, tag = 'input window, operand 5, single buffered']
    #allocation12 [shape = 'u8[8192]{0}', space=vmem, size = 0x2000, scoped, tag = 'output window, operand 0']
    %14 = vsyncpa [#allocation4], 0
    %s15 = scalar_lea.sflag [#allocation4], 1
    %16 = vsyncpa %s15, 0
    %17 = vsyncpa [#allocation7], 0
    %s18 = scalar_lea.sflag [#allocation7], 1
    %19 = vsyncpa %s18, 0
    %20 = vsyncpa [#allocation10], 0
    %21 = vsyncpa [#allocation5], 0
    %s22 = scalar_lea.sflag [#allocation5], 1
    %23 = vsyncpa %s22, 0
    loop: start=0, step=1, limit=4
    $region2: #{tpu_custom_call.1} parent=1 // loop_pre_header
      _
    $region3: #{tpu_custom_call.1} parent=1 // loop_header
      %s25 = sphi 0, %s29
      %p26 = scmp.ge.s32.totalorder %s25, 4
      %s32 = sphi 0, %s44
      %s33 = sphi 0, %s40
      %s34 = sphi 0, %s32
      %s35 = sphi 0, %s33
      %s36 = sphi 0, %s34
      %s37 = sphi 0, %s35
      %s49 = sphi 0, %s51
      %s52 = sphi 0, %s49
      %s53 = sphi 0, %s52
      %s69 = sphi 0, %s53
      %s75 = sphi 0, %s77
      %s78 = sphi 0, %s75
      %s79 = sphi 0, %s78
      %s95 = sphi 0, %s79
      %s101 = sphi 0, %s103
      %s104 = sphi 0, %s101
      %s105 = sphi 0, %s104
      %s121 = sphi 0, %s105
      %s125 = sphi 0, %s125
      %s127 = sphi 0, %s125
      %s128 = sphi 0, %s127
      %s142 = sphi 0, %s128
      %s146 = sphi 0, %s146
      %s148 = sphi 0, %s146
      %s149 = sphi 0, %s148
      %s163 = sphi 0, %s149
      %s167 = sphi 0, %s167
      %s169 = sphi 0, %s167
      %s170 = sphi 0, %s169
      %s184 = sphi 0, %s170
      %s188 = sphi 0, %s188
      %s190 = sphi 0, %s188
      %s191 = sphi 0, %s190
      %s205 = sphi 0, %s191
      %s209 = sphi 0, %s209
      %s211 = sphi 0, %s209
      %s212 = sphi 0, %s211
      %s226 = sphi 0, %s212
      %s230 = sphi 0, %s230
      %s232 = sphi 0, %s230
      %s233 = sphi 0, %s232
      %s247 = sphi 0, %s233
      %s255 = sphi 0, %s257
      %s258 = sphi 0, %s255
      %s259 = sphi 0, %s258
      %s275 = sphi 0, %s259
    $region4: #{tpu_custom_call.1} parent=1 // loop_header_branch
      %28 = sbr.rel (%p26) target = $region8
    $region5: #{tpu_custom_call.1} parent=1 // loop_body
      %s30 = ssub.s32 %s25, 1
      %s31 = ssub.s32 %s25, 2
      %s38 = sadd.s32 1, %s33
      %p39 = scmp.ge.s32.totalorder %s38, 1
      %s40 = scalar_select %p39, 0, %s38
      %s41 = sadd.s32 1, %s32
      %s42 = scalar_select %p39, %s41, %s32
      %p43 = scmp.ge.s32.totalorder %s42, 2
      %s44 = scalar_select %p43, 0, %s42
      %s45 = ssub.s32 %s32, %s44
      %s46 = ssub.s32 %s33, %s40
      %s47 = sor.u32 %s45, %s46
      %p48 = scmp.eq.s32.totalorder %s47, 0
      %s50 = sadd.s32 %s49, 1
      %s51 = scalar_select %p48, %s49, %s50
      %p54 = pneg %p48
      %p55 = scmp.eq.s32.totalorder %s25, 1
      %p56 = por %p54, %p55
      %p57 = scmp.ne.s32.totalorder %s49, %s52
      %p58 = scmp.eq.s32.totalorder %s25, 0
      %p59 = por %p57, %p58
      %p60 = scmp.ne.s32.totalorder %s49, %s52
      %p61 = scmp.eq.s32.totalorder %s30, 1
      %p62 = por %p60, %p61
      %p63 = scmp.ne.s32.totalorder %s52, %s53
      %p64 = scmp.eq.s32.totalorder %s30, 0
      %p65 = por %p63, %p64
      %p66 = scmp.ne.s32.totalorder %s52, %s53
      %p67 = scmp.eq.s32.totalorder %s31, 1
      %p68 = por %p66, %p67
      %p70 = scmp.ne.s32.totalorder %s53, %s69
      %p71 = scmp.eq.s32.totalorder %s31, 0
      %p72 = por %p70, %p71
      %s73 = ssub.s32 %s32, %s44
      %p74 = scmp.eq.s32.totalorder %s73, 0
      %s76 = sadd.s32 %s75, 1
      %s77 = scalar_select %p74, %s75, %s76
      %p80 = pneg %p74
      %p81 = scmp.eq.s32.totalorder %s25, 1
      %p82 = por %p80, %p81
      %p83 = scmp.ne.s32.totalorder %s75, %s78
      %p84 = scmp.eq.s32.totalorder %s25, 0
      %p85 = por %p83, %p84
      %p86 = scmp.ne.s32.totalorder %s75, %s78
      %p87 = scmp.eq.s32.totalorder %s30, 1
      %p88 = por %p86, %p87
      %p89 = scmp.ne.s32.totalorder %s78, %s79
      %p90 = scmp.eq.s32.totalorder %s30, 0
      %p91 = por %p89, %p90
      %p92 = scmp.ne.s32.totalorder %s78, %s79
      %p93 = scmp.eq.s32.totalorder %s31, 1
      %p94 = por %p92, %p93
      %p96 = scmp.ne.s32.totalorder %s79, %s95
      %p97 = scmp.eq.s32.totalorder %s31, 0
      %p98 = por %p96, %p97
      %s99 = ssub.s32 %s32, %s44
      %p100 = scmp.eq.s32.totalorder %s99, 0
      %s102 = sadd.s32 %s101, 1
      %s103 = scalar_select %p100, %s101, %s102
      %p106 = pneg %p100
      %p107 = scmp.eq.s32.totalorder %s25, 1
      %p108 = por %p106, %p107
      %p109 = scmp.ne.s32.totalorder %s101, %s104
      %p110 = scmp.eq.s32.totalorder %s25, 0
      %p111 = por %p109, %p110
      %p112 = scmp.ne.s32.totalorder %s101, %s104
      %p113 = scmp.eq.s32.totalorder %s30, 1
      %p114 = por %p112, %p113
      %p115 = scmp.ne.s32.totalorder %s104, %s105
      %p116 = scmp.eq.s32.totalorder %s30, 0
      %p117 = por %p115, %p116
      %p118 = scmp.ne.s32.totalorder %s104, %s105
      %p119 = scmp.eq.s32.totalorder %s31, 1
      %p120 = por %p118, %p119
      %p122 = scmp.ne.s32.totalorder %s105, %s121
      %p123 = scmp.eq.s32.totalorder %s31, 0
      %p124 = por %p122, %p123
      %s126 = sadd.s32 %s125, 1
      %p129 = scmp.eq.s32.totalorder %s25, 1
      %p130 = scmp.ne.s32.totalorder %s125, %s127
      %p131 = scmp.eq.s32.totalorder %s25, 0
      %p132 = por %p130, %p131
      %p133 = scmp.ne.s32.totalorder %s125, %s127
      %p134 = scmp.eq.s32.totalorder %s30, 1
      %p135 = por %p133, %p134
      %p136 = scmp.ne.s32.totalorder %s127, %s128
      %p137 = scmp.eq.s32.totalorder %s30, 0
      %p138 = por %p136, %p137
      %p139 = scmp.ne.s32.totalorder %s127, %s128
      %p140 = scmp.eq.s32.totalorder %s31, 1
      %p141 = por %p139, %p140
      %p143 = scmp.ne.s32.totalorder %s128, %s142
      %p144 = scmp.eq.s32.totalorder %s31, 0
      %p145 = por %p143, %p144
      %s147 = sadd.s32 %s146, 1
      %p150 = scmp.eq.s32.totalorder %s25, 1
      %p151 = scmp.ne.s32.totalorder %s146, %s148
      %p152 = scmp.eq.s32.totalorder %s25, 0
      %p153 = por %p151, %p152
      %p154 = scmp.ne.s32.totalorder %s146, %s148
      %p155 = scmp.eq.s32.totalorder %s30, 1
      %p156 = por %p154, %p155
      %p157 = scmp.ne.s32.totalorder %s148, %s149
      %p158 = scmp.eq.s32.totalorder %s30, 0
      %p159 = por %p157, %p158
      %p160 = scmp.ne.s32.totalorder %s148, %s149
      %p161 = scmp.eq.s32.totalorder %s31, 1
      %p162 = por %p160, %p161
      %p164 = scmp.ne.s32.totalorder %s149, %s163
      %p165 = scmp.eq.s32.totalorder %s31, 0
      %p166 = por %p164, %p165
      %s168 = sadd.s32 %s167, 1
      %p171 = scmp.eq.s32.totalorder %s25, 1
      %p172 = scmp.ne.s32.totalorder %s167, %s169
      %p173 = scmp.eq.s32.totalorder %s25, 0
      %p174 = por %p172, %p173
      %p175 = scmp.ne.s32.totalorder %s167, %s169
      %p176 = scmp.eq.s32.totalorder %s30, 1
      %p177 = por %p175, %p176
      %p178 = scmp.ne.s32.totalorder %s169, %s170
      %p179 = scmp.eq.s32.totalorder %s30, 0
      %p180 = por %p178, %p179
      %p181 = scmp.ne.s32.totalorder %s169, %s170
      %p182 = scmp.eq.s32.totalorder %s31, 1
      %p183 = por %p181, %p182
      %p185 = scmp.ne.s32.totalorder %s170, %s184
      %p186 = scmp.eq.s32.totalorder %s31, 0
      %p187 = por %p185, %p186
      %s189 = sadd.s32 %s188, 1
      %p192 = scmp.eq.s32.totalorder %s25, 1
      %p193 = scmp.ne.s32.totalorder %s188, %s190
      %p194 = scmp.eq.s32.totalorder %s25, 0
      %p195 = por %p193, %p194
      %p196 = scmp.ne.s32.totalorder %s188, %s190
      %p197 = scmp.eq.s32.totalorder %s30, 1
      %p198 = por %p196, %p197
      %p199 = scmp.ne.s32.totalorder %s190, %s191
      %p200 = scmp.eq.s32.totalorder %s30, 0
      %p201 = por %p199, %p200
      %p202 = scmp.ne.s32.totalorder %s190, %s191
      %p203 = scmp.eq.s32.totalorder %s31, 1
      %p204 = por %p202, %p203
      %p206 = scmp.ne.s32.totalorder %s191, %s205
      %p207 = scmp.eq.s32.totalorder %s31, 0
      %p208 = por %p206, %p207
      %s210 = sadd.s32 %s209, 1
      %p213 = scmp.eq.s32.totalorder %s25, 1
      %p214 = scmp.ne.s32.totalorder %s209, %s211
      %p215 = scmp.eq.s32.totalorder %s25, 0
      %p216 = por %p214, %p215
      %p217 = scmp.ne.s32.totalorder %s209, %s211
      %p218 = scmp.eq.s32.totalorder %s30, 1
      %p219 = por %p217, %p218
      %p220 = scmp.ne.s32.totalorder %s211, %s212
      %p221 = scmp.eq.s32.totalorder %s30, 0
      %p222 = por %p220, %p221
      %p223 = scmp.ne.s32.totalorder %s211, %s212
      %p224 = scmp.eq.s32.totalorder %s31, 1
      %p225 = por %p223, %p224
      %p227 = scmp.ne.s32.totalorder %s212, %s226
      %p228 = scmp.eq.s32.totalorder %s31, 0
      %p229 = por %p227, %p228
      %s231 = sadd.s32 %s230, 1
      %p234 = scmp.eq.s32.totalorder %s25, 1
      %p235 = scmp.ne.s32.totalorder %s230, %s232
      %p236 = scmp.eq.s32.totalorder %s25, 0
      %p237 = por %p235, %p236
      %p238 = scmp.ne.s32.totalorder %s230, %s232
      %p239 = scmp.eq.s32.totalorder %s30, 1
      %p240 = por %p238, %p239
      %p241 = scmp.ne.s32.totalorder %s232, %s233
      %p242 = scmp.eq.s32.totalorder %s30, 0
      %p243 = por %p241, %p242
      %p244 = scmp.ne.s32.totalorder %s232, %s233
      %p245 = scmp.eq.s32.totalorder %s31, 1
      %p246 = por %p244, %p245
      %p248 = scmp.ne.s32.totalorder %s233, %s247
      %p249 = scmp.eq.s32.totalorder %s31, 0
      %p250 = por %p248, %p249
      %s251 = ssub.s32 %s32, %s44
      %s252 = ssub.s32 %s33, %s40
      %s253 = sor.u32 %s251, %s252
      %p254 = scmp.eq.s32.totalorder %s253, 0
      %s256 = sadd.s32 %s255, 1
      %s257 = scalar_select %p254, %s255, %s256
      %p260 = pneg %p254
      %p261 = scmp.eq.s32.totalorder %s25, 1
      %p262 = por %p260, %p261
      %p263 = scmp.ne.s32.totalorder %s255, %s258
      %p264 = scmp.eq.s32.totalorder %s25, 0
      %p265 = por %p263, %p264
      %p266 = scmp.ne.s32.totalorder %s255, %s258
      %p267 = scmp.eq.s32.totalorder %s30, 1
      %p268 = por %p266, %p267
      %p269 = scmp.ne.s32.totalorder %s258, %s259
      %p270 = scmp.eq.s32.totalorder %s30, 0
      %p271 = por %p269, %p270
      %p272 = scmp.ne.s32.totalorder %s258, %s259
      %p273 = scmp.eq.s32.totalorder %s31, 1
      %p274 = por %p272, %p273
      %p276 = scmp.ne.s32.totalorder %s259, %s275
      %p277 = scmp.eq.s32.totalorder %s31, 0
      %p278 = por %p276, %p277
      %p279 = scmp.le.s32.totalorder 1, %s25
      %p280 = scmp.lt.s32.totalorder %s25, 3
      %p281 = pnand %p279, %p280
      %p282 = pneg %p281
      // Predicated region
      $region9: #{tpu_custom_call.1} parent=5 // pred_check
        _
      $region10: #{tpu_custom_call.1} parent=5 // pred_check_branch
        %284 = sbr.rel (%p281) target = $region12
      $region11: #{tpu_custom_call.1} parent=5 // pred_region
        %s285 = ssub.s32 %s25, 1
        // Predicated region
        $region13: #{tpu_custom_call.1} parent=11 // pred_check
          %p286 = pneg %p138
        $region14: #{tpu_custom_call.1} parent=11 // pred_check_branch
          %288 = sbr.rel (%p286) target = $region16
        $region15: #{tpu_custom_call.1} parent=11 // pred_region
          %s290 = ssub.s32 3072, 3072
          %291 = vsyncadd [#allocation10], %s290
          %s292 = sshll.u32 [#allocation9], 4
          %s293 = int_to_ptr.vmem [resolvable:$true] %s292
          %298 = dma.hbm_to_vmem [thread:$0]  %s3, 3072, %s293, [#allocation10], 192, 192, 12
        $region16: #{tpu_custom_call.1} parent=11 // pred_fallthru
          _
        // Predicated region
        $region17: #{tpu_custom_call.1} parent=11 // pred_check
          %p299 = pneg %p159
        $region18: #{tpu_custom_call.1} parent=11 // pred_check_branch
          %301 = sbr.rel (%p299) target = $region20
        $region19: #{tpu_custom_call.1} parent=11 // pred_region
          _
        $region20: #{tpu_custom_call.1} parent=11 // pred_fallthru
          _
        // Predicated region
        $region21: #{tpu_custom_call.1} parent=11 // pred_check
          %p302 = pneg %p180
        $region22: #{tpu_custom_call.1} parent=11 // pred_check_branch
          %304 = sbr.rel (%p302) target = $region24
        $region23: #{tpu_custom_call.1} parent=11 // pred_region
          %s306 = ssub.s32 1024, 1024
          %307 = vsyncadd [#allocation10], %s306
          %s308 = sshll.u32 [#allocation11], 4
          %s309 = int_to_ptr.vmem [resolvable:$true] %s308
          %314 = dma.hbm_to_vmem [thread:$0]  %s5, 1024, %s309, [#allocation10], 64, 64, 4
        $region24: #{tpu_custom_call.1} parent=11 // pred_fallthru
          _
        // Predicated region
        $region25: #{tpu_custom_call.1} parent=11 // pred_check
          %p315 = pneg %p201
        $region26: #{tpu_custom_call.1} parent=11 // pred_check_branch
          %317 = sbr.rel (%p315) target = $region28
        $region27: #{tpu_custom_call.1} parent=11 // pred_region
          _
        $region28: #{tpu_custom_call.1} parent=11 // pred_fallthru
          _
        // Predicated region
        $region29: #{tpu_custom_call.1} parent=11 // pred_check
          %p318 = pneg %p222
        $region30: #{tpu_custom_call.1} parent=11 // pred_check_branch
          %320 = sbr.rel (%p318) target = $region32
        $region31: #{tpu_custom_call.1} parent=11 // pred_region
          _
        $region32: #{tpu_custom_call.1} parent=11 // pred_fallthru
          _
        // Predicated region
        $region33: #{tpu_custom_call.1} parent=11 // pred_check
          %p321 = pneg %p243
        $region34: #{tpu_custom_call.1} parent=11 // pred_check_branch
          %323 = sbr.rel (%p321) target = $region36
        $region35: #{tpu_custom_call.1} parent=11 // pred_region
          _
        $region36: #{tpu_custom_call.1} parent=11 // pred_fallthru
          _
      $region12: #{tpu_custom_call.1} parent=5 // pred_fallthru
        _
      %p324 = scmp.lt.s32.totalorder %s25, 2
      // Predicated region
      $region37: #{tpu_custom_call.1} parent=5 // pred_check
        %p325 = pneg %p324
      $region38: #{tpu_custom_call.1} parent=5 // pred_check_branch
        %327 = sbr.rel (%p325) target = $region40
      $region39: #{tpu_custom_call.1} parent=5 // pred_region
        // Predicated region
        $region41: #{tpu_custom_call.1} parent=39 // pred_check
          %p328 = pneg %p59
        $region42: #{tpu_custom_call.1} parent=39 // pred_check_branch
          %330 = sbr.rel (%p328) target = $region44
        $region43: #{tpu_custom_call.1} parent=39 // pred_region
          %s331 = sand.u32 %s49, 1
          %s332 = scalar_lea.sflag [#allocation4], %s331
          %s333 = sand.u32 %s49, 1
          %s334 = smul.addr %s333, 8
          %s335 = scalar_lea.vmem [#allocation3], %s334
          %s337 = ssub.s32 128, 128
          %338 = vsyncadd %s332, %s337
          %s339 = sadd.s32 %s33, %s32
          %s340 = smul.addr %s339, 128
          %s341 = scalar_lea.hbm %s0, %s340
          %s343 = sshll.u32 %s335, 4
          %s344 = int_to_ptr.vmem [resolvable:$true] %s343
          %346 = dma.hbm_to_vmem [thread:$0]  %s341, 128, %s344, %s332
        $region44: #{tpu_custom_call.1} parent=39 // pred_fallthru
          _
        // Predicated region
        $region45: #{tpu_custom_call.1} parent=39 // pred_check
          %p347 = pneg %p85
        $region46: #{tpu_custom_call.1} parent=39 // pred_check_branch
          %349 = sbr.rel (%p347) target = $region48
        $region47: #{tpu_custom_call.1} parent=39 // pred_region
          %s350 = sand.u32 %s25, 1
          %s351 = scalar_lea.sflag [#allocation7], %s350
          %s352 = sand.u32 %s75, 1
          %s353 = smul.addr %s352, 16
          %s354 = scalar_lea.vmem [#allocation6], %s353
          %s356 = ssub.s32 256, 256
          %357 = vsyncadd %s351, %s356
          %s358 = smul.addr %s32, 2
          %s359 = smul.addr %s358, 128
          %s360 = scalar_lea.hbm %s1, %s359
          %s361 = sshll.u32 %s354, 4
          %s362 = int_to_ptr.vmem [resolvable:$true] %s361
          %367 = dma.hbm_to_vmem [thread:$0]  %s360, 256, %s362, %s351, 128, 128, 8
        $region48: #{tpu_custom_call.1} parent=39 // pred_fallthru
          _
        // Predicated region
        $region49: #{tpu_custom_call.1} parent=39 // pred_check
          %p368 = pneg %p111
        $region50: #{tpu_custom_call.1} parent=39 // pred_check_branch
          %370 = sbr.rel (%p368) target = $region52
        $region51: #{tpu_custom_call.1} parent=39 // pred_region
          %s371 = sand.u32 %s25, 1
          %s372 = scalar_lea.sflag [#allocation7], %s371
          %s373 = sand.u32 %s101, 1
          %s374 = smul.addr %s373, 16
          %s375 = scalar_lea.vmem [#allocation8], %s374
          %s377 = ssub.s32 256, 256
          %378 = vsyncadd %s372, %s377
          %s379 = smul.addr %s32, 2
          %s380 = smul.addr %s379, 128
          %s381 = scalar_lea.hbm %s2, %s380
          %s382 = sshll.u32 %s375, 4
          %s383 = int_to_ptr.vmem [resolvable:$true] %s382
          %388 = dma.hbm_to_vmem [thread:$0]  %s381, 256, %s383, %s372, 128, 128, 8
        $region52: #{tpu_custom_call.1} parent=39 // pred_fallthru
          _
      $region40: #{tpu_custom_call.1} parent=5 // pred_fallthru
        _
      %p389 = scmp.le.s32.totalorder 1, %s25
      %p390 = scmp.lt.s32.totalorder %s25, 3
      %p391 = pnand %p389, %p390
      %p392 = pneg %p391
      // Predicated region
      $region53: #{tpu_custom_call.1} parent=5 // pred_check
        _
      $region54: #{tpu_custom_call.1} parent=5 // pred_check_branch
        %394 = sbr.rel (%p391) target = $region56
      $region55: #{tpu_custom_call.1} parent=5 // pred_region
        %s395 = ssub.s32 %s25, 1
        %s396 = sand.u32 %s52, 1
        %s397 = scalar_lea.sflag [#allocation4], %s396
        %s398 = sand.u32 %s52, 1
        %s399 = smul.addr %s398, 8
        %s400 = scalar_lea.vmem [#allocation3], %s399
        // Predicated region
        $region57: #{tpu_custom_call.1} parent=55 // pred_check
          %p401 = pneg %p65
        $region58: #{tpu_custom_call.1} parent=55 // pred_check_branch
          %403 = sbr.rel (%p401) target = $region60
        $region59: #{tpu_custom_call.1} parent=55 // pred_region
          %404 = dma.done %s397, 128
        $region60: #{tpu_custom_call.1} parent=55 // pred_fallthru
          _
        %s405 = sand.u32 %s30, 1
        %s406 = scalar_lea.sflag [#allocation7], %s405
        %s407 = sand.u32 %s78, 1
        %s408 = smul.addr %s407, 16
        %s409 = scalar_lea.vmem [#allocation6], %s408
        // Predicated region
        $region61: #{tpu_custom_call.1} parent=55 // pred_check
          %p410 = pneg %p91
        $region62: #{tpu_custom_call.1} parent=55 // pred_check_branch
          %412 = sbr.rel (%p410) target = $region64
        $region63: #{tpu_custom_call.1} parent=55 // pred_region
          %413 = dma.done %s406, 256
        $region64: #{tpu_custom_call.1} parent=55 // pred_fallthru
          _
        %s414 = sand.u32 %s30, 1
        %s415 = scalar_lea.sflag [#allocation7], %s414
        %s416 = sand.u32 %s104, 1
        %s417 = smul.addr %s416, 16
        %s418 = scalar_lea.vmem [#allocation8], %s417
        // Predicated region
        $region65: #{tpu_custom_call.1} parent=55 // pred_check
          %p419 = pneg %p117
        $region66: #{tpu_custom_call.1} parent=55 // pred_check_branch
          %421 = sbr.rel (%p419) target = $region68
        $region67: #{tpu_custom_call.1} parent=55 // pred_region
          %422 = dma.done %s415, 256
        $region68: #{tpu_custom_call.1} parent=55 // pred_fallthru
          _
        // Predicated region
        $region69: #{tpu_custom_call.1} parent=55 // pred_check
          %p423 = pneg %p138
        $region70: #{tpu_custom_call.1} parent=55 // pred_check_branch
          %425 = sbr.rel (%p423) target = $region72
        $region71: #{tpu_custom_call.1} parent=55 // pred_region
          %426 = dma.done [#allocation10], 3072
        $region72: #{tpu_custom_call.1} parent=55 // pred_fallthru
          _
        // Predicated region
        $region73: #{tpu_custom_call.1} parent=55 // pred_check
          %p427 = pneg %p180
        $region74: #{tpu_custom_call.1} parent=55 // pred_check_branch
          %429 = sbr.rel (%p427) target = $region76
        $region75: #{tpu_custom_call.1} parent=55 // pred_region
          %430 = dma.done [#allocation10], 1024
        $region76: #{tpu_custom_call.1} parent=55 // pred_fallthru
          _
        %s431 = sand.u32 %s52, 1
        %s432 = scalar_lea.sflag [#allocation4], %s431
        %s433 = sand.u32 %s52, 1
        %s434 = smul.addr %s433, 8
        %s435 = scalar_lea.vmem [#allocation3], %s434
        %p436 = pneg %p65
        %p437 = pneg %p62
        %s438 = sand.u32 %s30, 1
        %s439 = scalar_lea.sflag [#allocation7], %s438
        %s440 = sand.u32 %s78, 1
        %s441 = smul.addr %s440, 16
        %s442 = scalar_lea.vmem [#allocation6], %s441
        %p443 = pneg %p91
        %p444 = pneg %p88
        %s445 = sand.u32 %s30, 1
        %s446 = scalar_lea.sflag [#allocation7], %s445
        %s447 = sand.u32 %s104, 1
        %s448 = smul.addr %s447, 16
        %s449 = scalar_lea.vmem [#allocation8], %s448
        %p450 = pneg %p117
        %p451 = pneg %p114
        %p452 = pneg %p138
        %p453 = pneg %p135
        %p454 = pneg %p159
        %p455 = pneg %p156
        %p456 = pneg %p180
        %p457 = pneg %p177
        %p458 = pneg %p201
        %p459 = pneg %p198
        %p460 = pneg %p222
        %p461 = pneg %p219
        %p462 = pneg %p243
        %p463 = pneg %p240
        %p464 = pneg %p271
        %p465 = pneg %p268
        %s466 = sand.u32 %s258, 1
        %s467 = scalar_lea.sflag [#allocation5], %s466
        %s468 = sand.u32 %s258, 1
        %s469 = smul.addr %s468, 8
        %s470 = scalar_lea.vmem [#allocation12], %s469
        %v472 = vld [vmem:[%s400] sm:$0xff]
        %v473 = vpack.c.bf16 %v472, %v472
        %v474 = vld [vmem:[%s409] sm:$0xff]
        %v475 = vld [vmem:[%s409 + $0x8] sm:$0xff]
        %v476 = vpack.c.bf16 %v475, %v474
        %v477 = vld [vmem:[%s418] sm:$0xff]
        %v478 = vld [vmem:[%s418 + $0x8] sm:$0xff]
        %v479 = vpack.c.bf16 %v478, %v477
        %v480 = vld [vmem:[#allocation9] sm:$0xf]
        %v481 = vld [vmem:[#allocation9 + $0xc] sm:$0xf]
        %v482 = vld [vmem:[#allocation9 + $0x18] sm:$0xf]
        %v483 = vld [vmem:[#allocation9 + $0x24] sm:$0xf]
        %v484 = vld [vmem:[#allocation9 + $0x30] sm:$0xf]
        %v485 = vld [vmem:[#allocation9 + $0x3c] sm:$0xf]
        %v486 = vld [vmem:[#allocation9 + $0x48] sm:$0xf]
        %v487 = vld [vmem:[#allocation9 + $0x54] sm:$0xf]
        %v488 = vld [vmem:[#allocation9 + $0x60] sm:$0xf]
        %v489 = vld [vmem:[#allocation9 + $0x6c] sm:$0xf]
        %v490 = vld [vmem:[#allocation9 + $0x78] sm:$0xf]
        %v491 = vld [vmem:[#allocation9 + $0x84] sm:$0xf]
        %v492 = vld [vmem:[#allocation9 + $0x90] sm:$0xf]
        %v493 = vld [vmem:[#allocation9 + $0x9c] sm:$0xf]
        %v494 = vld [vmem:[#allocation9 + $0xa8] sm:$0xf]
        %v495 = vld [vmem:[#allocation9 + $0xb4] sm:$0xf]
        %v496 = vld [vmem:[%s4] sm:$0x1]
        %v497 = vlaneseq
        %v498 = vshrl.u32 %v497, 7
        %v499 = vsub.s32 0, %v498
        %v500 = vrot.slane %v496, %v499
        %v517 = vunpack.c.l.b16 %v480
        %v518 = vunpack.c.l.b16 %v481
        %v519 = vunpack.c.l.b16 %v482
        %v520 = vunpack.c.l.b16 %v483
        %v521 = vunpack.c.l.b16 %v484
        %v522 = vunpack.c.l.b16 %v485
        %v523 = vunpack.c.l.b16 %v486
        %v524 = vunpack.c.l.b16 %v487
        %v525 = vunpack.c.l.b16 %v488
        %v526 = vunpack.c.l.b16 %v489
        %v527 = vunpack.c.l.b16 %v490
        %v528 = vunpack.c.l.b16 %v491
        %v529 = vunpack.c.l.b16 %v492
        %v530 = vunpack.c.l.b16 %v493
        %v531 = vunpack.c.l.b16 %v494
        %v532 = vunpack.c.l.b16 %v495
        %v533 = vpack.c.b16 %v518, %v517
        %v534 = vpack.c.b16 %v520, %v519
        %v535 = vpack.c.b16 %v522, %v521
        %v536 = vpack.c.b16 %v524, %v523
        %v537 = vpack.c.b16 %v526, %v525
        %v538 = vpack.c.b16 %v528, %v527
        %v539 = vpack.c.b16 %v530, %v529
        %v540 = vpack.c.b16 %v532, %v531
        %549 = vmatprep.subr.bf16.mxu0 0
        %550 = vmatpush1.bf16.msra.mxu0 %v533
        %551 = vmatprep.subr.bf16.mxu0 0
        %552 = vmatpush1.bf16.msra.mxu0 %v534
        %553 = vmatprep.subr.bf16.mxu0 0
        %554 = vmatpush1.bf16.msra.mxu0 %v535
        %555 = vmatprep.subr.bf16.mxu0 0
        %556 = vmatpush1.bf16.msra.mxu0 %v536
        %557 = vmatprep.subr.bf16.mxu0 0
        %558 = vmatpush1.bf16.msra.mxu0 %v537
        %559 = vmatprep.subr.bf16.mxu0 0
        %560 = vmatpush1.bf16.msra.mxu0 %v538
        %561 = vmatprep.subr.bf16.mxu0 0
        %562 = vmatpush1.bf16.msra.mxu0 %v539
        %563 = vmatprep.subr.bf16.mxu0 0
        %564 = vmatpush1.bf16.msra.mxu0 %v540
        %565 = vmatprep.subr.bf16.mxu0 0
        %566 = vmatpush1.bf16.msra.mxu0 0
        %567 = vmatprep.subr.bf16.mxu0 0
        %568 = vmatpush1.bf16.msra.mxu0 0
        %569 = vmatprep.subr.bf16.mxu0 0
        %570 = vmatpush1.bf16.msra.mxu0 0
        %571 = vmatprep.subr.bf16.mxu0 0
        %572 = vmatpush1.bf16.msra.mxu0 0
        %573 = vmatprep.subr.bf16.mxu0 0
        %574 = vmatpush1.bf16.msra.mxu0 0
        %575 = vmatprep.subr.bf16.mxu0 0
        %576 = vmatpush1.bf16.msra.mxu0 0
        %577 = vmatprep.subr.bf16.mxu0 0
        %578 = vmatpush1.bf16.msra.mxu0 0
        %579 = vmatprep.subr.bf16.mxu0 0
        %580 = vmatpush1.bf16.msra.mxu0 0
        %581 = vmatprep.mubr.bf16.mxu0 0
        %582 = vmatmul.mubr.bf16.gmra.mrb[0].mxu0 %v473
        %v583 = vpop.f32.mrb[0].mxu0
        %v584 = vadd.f32 %v500, %v583
        %v585 = vpop.f32.mrb[0].mxu0
        %v586 = vpop.f32.mrb[0].mxu0
        %v587 = vpop.f32.mrb[0].mxu0
        %588 = vdwg.mxu0
        %v589 = vld [vmem:[#allocation9 + $0x4] sm:$0xf]
        %v590 = vld [vmem:[#allocation9 + $0x10] sm:$0xf]
        %v591 = vld [vmem:[#allocation9 + $0x1c] sm:$0xf]
        %v592 = vld [vmem:[#allocation9 + $0x28] sm:$0xf]
        %v593 = vld [vmem:[#allocation9 + $0x34] sm:$0xf]
        %v594 = vld [vmem:[#allocation9 + $0x40] sm:$0xf]
        %v595 = vld [vmem:[#allocation9 + $0x4c] sm:$0xf]
        %v596 = vld [vmem:[#allocation9 + $0x58] sm:$0xf]
        %v597 = vld [vmem:[#allocation9 + $0x64] sm:$0xf]
        %v598 = vld [vmem:[#allocation9 + $0x70] sm:$0xf]
        %v599 = vld [vmem:[#allocation9 + $0x7c] sm:$0xf]
        %v600 = vld [vmem:[#allocation9 + $0x88] sm:$0xf]
        %v601 = vld [vmem:[#allocation9 + $0x94] sm:$0xf]
        %v602 = vld [vmem:[#allocation9 + $0xa0] sm:$0xf]
        %v603 = vld [vmem:[#allocation9 + $0xac] sm:$0xf]
        %v604 = vld [vmem:[#allocation9 + $0xb8] sm:$0xf]
        %v605 = vld [vmem:[%s4 + $0x1] sm:$0x1]
        %v606 = vlaneseq
        %v607 = vshrl.u32 %v606, 7
        %v608 = vsub.s32 0, %v607
        %v609 = vrot.slane %v605, %v608
        %v626 = vunpack.c.l.b16 %v589
        %v627 = vunpack.c.l.b16 %v590
        %v628 = vunpack.c.l.b16 %v591
        %v629 = vunpack.c.l.b16 %v592
        %v630 = vunpack.c.l.b16 %v593
        %v631 = vunpack.c.l.b16 %v594
        %v632 = vunpack.c.l.b16 %v595
        %v633 = vunpack.c.l.b16 %v596
        %v634 = vunpack.c.l.b16 %v597
        %v635 = vunpack.c.l.b16 %v598
        %v636 = vunpack.c.l.b16 %v599
        %v637 = vunpack.c.l.b16 %v600
        %v638 = vunpack.c.l.b16 %v601
        %v639 = vunpack.c.l.b16 %v602
        %v640 = vunpack.c.l.b16 %v603
        %v641 = vunpack.c.l.b16 %v604
        %v642 = vpack.c.b16 %v627, %v626
        %v643 = vpack.c.b16 %v629, %v628
        %v644 = vpack.c.b16 %v631, %v630
        %v645 = vpack.c.b16 %v633, %v632
        %v646 = vpack.c.b16 %v635, %v634
        %v647 = vpack.c.b16 %v637, %v636
        %v648 = vpack.c.b16 %v639, %v638
        %v649 = vpack.c.b16 %v641, %v640
        %658 = vmatprep.subr.bf16.mxu0 0
        %659 = vmatpush1.bf16.msra.mxu0 %v642
        %660 = vmatprep.subr.bf16.mxu0 0
        %661 = vmatpush1.bf16.msra.mxu0 %v643
        %662 = vmatprep.subr.bf16.mxu0 0
        %663 = vmatpush1.bf16.msra.mxu0 %v644
        %664 = vmatprep.subr.bf16.mxu0 0
        %665 = vmatpush1.bf16.msra.mxu0 %v645
        %666 = vmatprep.subr.bf16.mxu0 0
        %667 = vmatpush1.bf16.msra.mxu0 %v646
        %668 = vmatprep.subr.bf16.mxu0 0
        %669 = vmatpush1.bf16.msra.mxu0 %v647
        %670 = vmatprep.subr.bf16.mxu0 0
        %671 = vmatpush1.bf16.msra.mxu0 %v648
        %672 = vmatprep.subr.bf16.mxu0 0
        %673 = vmatpush1.bf16.msra.mxu0 %v649
        %674 = vmatprep.subr.bf16.mxu0 0
        %675 = vmatpush1.bf16.msra.mxu0 0
        %676 = vmatprep.subr.bf16.mxu0 0
        %677 = vmatpush1.bf16.msra.mxu0 0
        %678 = vmatprep.subr.bf16.mxu0 0
        %679 = vmatpush1.bf16.msra.mxu0 0
        %680 = vmatprep.subr.bf16.mxu0 0
        %681 = vmatpush1.bf16.msra.mxu0 0
        %682 = vmatprep.subr.bf16.mxu0 0
        %683 = vmatpush1.bf16.msra.mxu0 0
        %684 = vmatprep.subr.bf16.mxu0 0
        %685 = vmatpush1.bf16.msra.mxu0 0
        %686 = vmatprep.subr.bf16.mxu0 0
        %687 = vmatpush1.bf16.msra.mxu0 0
        %688 = vmatprep.subr.bf16.mxu0 0
        %689 = vmatpush1.bf16.msra.mxu0 0
        %690 = vmatprep.mubr.bf16.mxu0 0
        %691 = vmatmul.mubr.bf16.gmra.mrb[0].mxu0 %v476
        %v692 = vpop.f32.mrb[0].mxu0
        %v693 = vadd.f32 %v609, %v692
        %v694 = vpop.f32.mrb[0].mxu0
        %v695 = vpop.f32.mrb[0].mxu0
        %v696 = vadd.f32 %v609, %v695
        %v697 = vpop.f32.mrb[0].mxu0
        %698 = vdwg.mxu0
        %v699 = vld [vmem:[#allocation9 + $0x8] sm:$0xf]
        %v700 = vld [vmem:[#allocation9 + $0x14] sm:$0xf]
        %v701 = vld [vmem:[#allocation9 + $0x20] sm:$0xf]
        %v702 = vld [vmem:[#allocation9 + $0x2c] sm:$0xf]
        %v703 = vld [vmem:[#allocation9 + $0x38] sm:$0xf]
        %v704 = vld [vmem:[#allocation9 + $0x44] sm:$0xf]
        %v705 = vld [vmem:[#allocation9 + $0x50] sm:$0xf]
        %v706 = vld [vmem:[#allocation9 + $0x5c] sm:$0xf]
        %v707 = vld [vmem:[#allocation9 + $0x68] sm:$0xf]
        %v708 = vld [vmem:[#allocation9 + $0x74] sm:$0xf]
        %v709 = vld [vmem:[#allocation9 + $0x80] sm:$0xf]
        %v710 = vld [vmem:[#allocation9 + $0x8c] sm:$0xf]
        %v711 = vld [vmem:[#allocation9 + $0x98] sm:$0xf]
        %v712 = vld [vmem:[#allocation9 + $0xa4] sm:$0xf]
        %v713 = vld [vmem:[#allocation9 + $0xb0] sm:$0xf]
        %v714 = vld [vmem:[#allocation9 + $0xbc] sm:$0xf]
        %v715 = vld [vmem:[%s4 + $0x2] sm:$0x1]
        %v716 = vlaneseq
        %v717 = vshrl.u32 %v716, 7
        %v718 = vsub.s32 0, %v717
        %v719 = vrot.slane %v715, %v718
        %v736 = vunpack.c.l.b16 %v699
        %v737 = vunpack.c.l.b16 %v700
        %v738 = vunpack.c.l.b16 %v701
        %v739 = vunpack.c.l.b16 %v702
        %v740 = vunpack.c.l.b16 %v703
        %v741 = vunpack.c.l.b16 %v704
        %v742 = vunpack.c.l.b16 %v705
        %v743 = vunpack.c.l.b16 %v706
        %v744 = vunpack.c.l.b16 %v707
        %v745 = vunpack.c.l.b16 %v708
        %v746 = vunpack.c.l.b16 %v709
        %v747 = vunpack.c.l.b16 %v710
        %v748 = vunpack.c.l.b16 %v711
        %v749 = vunpack.c.l.b16 %v712
        %v750 = vunpack.c.l.b16 %v713
        %v751 = vunpack.c.l.b16 %v714
        %v752 = vpack.c.b16 %v737, %v736
        %v753 = vpack.c.b16 %v739, %v738
        %v754 = vpack.c.b16 %v741, %v740
        %v755 = vpack.c.b16 %v743, %v742
        %v756 = vpack.c.b16 %v745, %v744
        %v757 = vpack.c.b16 %v747, %v746
        %v758 = vpack.c.b16 %v749, %v748
        %v759 = vpack.c.b16 %v751, %v750
        %768 = vmatprep.subr.bf16.mxu0 0
        %769 = vmatpush1.bf16.msra.mxu0 %v752
        %770 = vmatprep.subr.bf16.mxu0 0
        %771 = vmatpush1.bf16.msra.mxu0 %v753
        %772 = vmatprep.subr.bf16.mxu0 0
        %773 = vmatpush1.bf16.msra.mxu0 %v754
        %774 = vmatprep.subr.bf16.mxu0 0
        %775 = vmatpush1.bf16.msra.mxu0 %v755
        %776 = vmatprep.subr.bf16.mxu0 0
        %777 = vmatpush1.bf16.msra.mxu0 %v756
        %778 = vmatprep.subr.bf16.mxu0 0
        %779 = vmatpush1.bf16.msra.mxu0 %v757
        %780 = vmatprep.subr.bf16.mxu0 0
        %781 = vmatpush1.bf16.msra.mxu0 %v758
        %782 = vmatprep.subr.bf16.mxu0 0
        %783 = vmatpush1.bf16.msra.mxu0 %v759
        %784 = vmatprep.subr.bf16.mxu0 0
        %785 = vmatpush1.bf16.msra.mxu0 0
        %786 = vmatprep.subr.bf16.mxu0 0
        %787 = vmatpush1.bf16.msra.mxu0 0
        %788 = vmatprep.subr.bf16.mxu0 0
        %789 = vmatpush1.bf16.msra.mxu0 0
        %790 = vmatprep.subr.bf16.mxu0 0
        %791 = vmatpush1.bf16.msra.mxu0 0
        %792 = vmatprep.subr.bf16.mxu0 0
        %793 = vmatpush1.bf16.msra.mxu0 0
        %794 = vmatprep.subr.bf16.mxu0 0
        %795 = vmatpush1.bf16.msra.mxu0 0
        %796 = vmatprep.subr.bf16.mxu0 0
        %797 = vmatpush1.bf16.msra.mxu0 0
        %798 = vmatprep.subr.bf16.mxu0 0
        %799 = vmatpush1.bf16.msra.mxu0 0
        %800 = vmatprep.mubr.bf16.mxu0 0
        %801 = vmatmul.mubr.bf16.gmra.mrb[0].mxu0 %v479
        %v802 = vpop.f32.mrb[0].mxu0
        %v803 = vadd.f32 %v719, %v802
        %v804 = vpop.f32.mrb[0].mxu0
        %v805 = vpop.f32.mrb[0].mxu0
        %v806 = vadd.f32 %v719, %v805
        %v807 = vpop.f32.mrb[0].mxu0
        %808 = vdwg.mxu0
        %v809 = vpack.c.bf16 %v584, %v584
        %v810 = vpack.c.bf16 %v696, %v693
        %v811 = vpack.c.bf16 %v806, %v803
        %vm812 = vcmask 523264
        %v814 = vsel %vm812, %v809, 0
        %v817 = vsel %vm812, %v810, 0
        %819 = vmatprep.subr.bf16.mxu0 0
        %820 = vmatpush1.bf16.xpose.msra.mxu0 %v817
        %821 = vmatprep.subr.bf16.mxu0 0
        %822 = vmatpush1.bf16.xpose.msra.mxu0 0
        %823 = vmatprep.subr.bf16.mxu0 0
        %824 = vmatpush1.bf16.xpose.msra.mxu0 0
        %825 = vmatprep.subr.bf16.mxu0 0
        %826 = vmatpush1.bf16.xpose.msra.mxu0 0
        %827 = vmatprep.subr.bf16.mxu0 0
        %828 = vmatpush1.bf16.xpose.msra.mxu0 0
        %829 = vmatprep.subr.bf16.mxu0 0
        %830 = vmatpush1.bf16.xpose.msra.mxu0 0
        %831 = vmatprep.subr.bf16.mxu0 0
        %832 = vmatpush1.bf16.xpose.msra.mxu0 0
        %833 = vmatprep.subr.bf16.mxu0 0
        %834 = vmatpush1.bf16.xpose.msra.mxu0 0
        %835 = vmatprep.subr.bf16.mxu0 0
        %836 = vmatpush1.bf16.xpose.msra.mxu0 0
        %837 = vmatprep.subr.bf16.mxu0 0
        %838 = vmatpush1.bf16.xpose.msra.mxu0 0
        %839 = vmatprep.subr.bf16.mxu0 0
        %840 = vmatpush1.bf16.xpose.msra.mxu0 0
        %841 = vmatprep.subr.bf16.mxu0 0
        %842 = vmatpush1.bf16.xpose.msra.mxu0 0
        %843 = vmatprep.subr.bf16.mxu0 0
        %844 = vmatpush1.bf16.xpose.msra.mxu0 0
        %845 = vmatprep.subr.bf16.mxu0 0
        %846 = vmatpush1.bf16.xpose.msra.mxu0 0
        %847 = vmatprep.subr.bf16.mxu0 0
        %848 = vmatpush1.bf16.xpose.msra.mxu0 0
        %849 = vmatprep.subr.bf16.mxu0 0
        %850 = vmatpush1.bf16.xpose.msra.mxu0 0
        %851 = vmatprep.mubr.bf16.mxu0 0
        %852 = vmatmul.mubr.bf16.gmra.mrb[0].mxu0 %v814
        %v853 = vpop.f32.mrb[0].mxu0
        %v854 = vadd.f32 0.0, %v853
        %v855 = vpop.f32.mrb[0].mxu0
        %v856 = vpop.f32.mrb[0].mxu0
        %v857 = vpop.f32.mrb[0].mxu0
        %858 = vdwg.mxu0
        %vm859 = vcmask 130048
        %v860 = vsel %vm859, %v854, -inf
        %861 = vmax.xlane.f32.xlu0 %v860
        %v862 = vpop.xlane.xlu0 %861
        %v863 = vsub.f32 %v854, %v862
        %v864 = vmul.f32 %v863, 1.442695
        %v865 = vpow.pop %v864
        %v866 = vsel %vm859, %v865, 0.0
        %867 = vadd.xlane.f32.xlu0 %v866
        %v868 = vpop.xlane.xlu0 %867
        %v869 = vrcp.pop %v868
        %v870 = vmul.f32 %v865, %v869
        %v871 = vpack.c.bf16 %v870, %v870
        %v873 = vsel %vm859, %v871, 0
        %875 = vmatprep.subr.bf16.mxu0 0
        %876 = vmatpush1.bf16.msra.mxu0 %v811
        %877 = vmatprep.subr.bf16.mxu0 0
        %878 = vmatpush1.bf16.msra.mxu0 0
        %879 = vmatprep.subr.bf16.mxu0 0
        %880 = vmatpush1.bf16.msra.mxu0 0
        %881 = vmatprep.subr.bf16.mxu0 0
        %882 = vmatpush1.bf16.msra.mxu0 0
        %883 = vmatprep.subr.bf16.mxu0 0
        %884 = vmatpush1.bf16.msra.mxu0 0
        %885 = vmatprep.subr.bf16.mxu0 0
        %886 = vmatpush1.bf16.msra.mxu0 0
        %887 = vmatprep.subr.bf16.mxu0 0
        %888 = vmatpush1.bf16.msra.mxu0 0
        %889 = vmatprep.subr.bf16.mxu0 0
        %890 = vmatpush1.bf16.msra.mxu0 0
        %891 = vmatprep.subr.bf16.mxu0 0
        %892 = vmatpush1.bf16.msra.mxu0 0
        %893 = vmatprep.subr.bf16.mxu0 0
        %894 = vmatpush1.bf16.msra.mxu0 0
        %895 = vmatprep.subr.bf16.mxu0 0
        %896 = vmatpush1.bf16.msra.mxu0 0
        %897 = vmatprep.subr.bf16.mxu0 0
        %898 = vmatpush1.bf16.msra.mxu0 0
        %899 = vmatprep.subr.bf16.mxu0 0
        %900 = vmatpush1.bf16.msra.mxu0 0
        %901 = vmatprep.subr.bf16.mxu0 0
        %902 = vmatpush1.bf16.msra.mxu0 0
        %903 = vmatprep.subr.bf16.mxu0 0
        %904 = vmatpush1.bf16.msra.mxu0 0
        %905 = vmatprep.subr.bf16.mxu0 0
        %906 = vmatpush1.bf16.msra.mxu0 0
        %907 = vmatprep.mubr.bf16.mxu0 0
        %908 = vmatmul.mubr.bf16.gmra.mrb[0].mxu0 %v873
        %v909 = vpop.f32.mrb[0].mxu0
        %v910 = vadd.f32 0.0, %v909
        %v911 = vpop.f32.mrb[0].mxu0
        %v912 = vpop.f32.mrb[0].mxu0
        %v913 = vpop.f32.mrb[0].mxu0
        %914 = vdwg.mxu0
        %v915 = vpack.c.bf16 %v910, %v910
        %vm916 = vcmask 519168
        %917 = vst.msk [vmem:[#allocation2] sm:$0xf] %vm916, %v915
        %919 = vrot.lane.b32.xlu0 %v809, 64
        %v920 = vpop.permute.xlu0 %919
        %922 = vrot.lane.b32.xlu0 %v810, 64
        %v923 = vpop.permute.xlu0 %922
        %v925 = vsel %vm812, %v920, 0
        %v928 = vsel %vm812, %v923, 0
        %930 = vmatprep.subr.bf16.mxu0 0
        %931 = vmatpush1.bf16.xpose.msra.mxu0 %v928
        %932 = vmatprep.subr.bf16.mxu0 0
        %933 = vmatpush1.bf16.xpose.msra.mxu0 0
        %934 = vmatprep.subr.bf16.mxu0 0
        %935 = vmatpush1.bf16.xpose.msra.mxu0 0
        %936 = vmatprep.subr.bf16.mxu0 0
        %937 = vmatpush1.bf16.xpose.msra.mxu0 0
        %938 = vmatprep.subr.bf16.mxu0 0
        %939 = vmatpush1.bf16.xpose.msra.mxu0 0
        %940 = vmatprep.subr.bf16.mxu0 0
        %941 = vmatpush1.bf16.xpose.msra.mxu0 0
        %942 = vmatprep.subr.bf16.mxu0 0
        %943 = vmatpush1.bf16.xpose.msra.mxu0 0
        %944 = vmatprep.subr.bf16.mxu0 0
        %945 = vmatpush1.bf16.xpose.msra.mxu0 0
        %946 = vmatprep.subr.bf16.mxu0 0
        %947 = vmatpush1.bf16.xpose.msra.mxu0 0
        %948 = vmatprep.subr.bf16.mxu0 0
        %949 = vmatpush1.bf16.xpose.msra.mxu0 0
        %950 = vmatprep.subr.bf16.mxu0 0
        %951 = vmatpush1.bf16.xpose.msra.mxu0 0
        %952 = vmatprep.subr.bf16.mxu0 0
        %953 = vmatpush1.bf16.xpose.msra.mxu0 0
        %954 = vmatprep.subr.bf16.mxu0 0
        %955 = vmatpush1.bf16.xpose.msra.mxu0 0
        %956 = vmatprep.subr.bf16.mxu0 0
        %957 = vmatpush1.bf16.xpose.msra.mxu0 0
        %958 = vmatprep.subr.bf16.mxu0 0
        %959 = vmatpush1.bf16.xpose.msra.mxu0 0
        %960 = vmatprep.subr.bf16.mxu0 0
        %961 = vmatpush1.bf16.xpose.msra.mxu0 0
        %962 = vmatprep.mubr.bf16.mxu0 0
        %963 = vmatmul.mubr.bf16.gmra.mrb[0].mxu0 %v925
        %v964 = vpop.f32.mrb[0].mxu0
        %v965 = vadd.f32 0.0, %v964
        %v966 = vpop.f32.mrb[0].mxu0
        %v967 = vpop.f32.mrb[0].mxu0
        %v968 = vpop.f32.mrb[0].mxu0
        %969 = vdwg.mxu0
        %v970 = vsel %vm859, %v965, -inf
        %971 = vmax.xlane.f32.xlu0 %v970
        %v972 = vpop.xlane.xlu0 %971
        %v973 = vsub.f32 %v965, %v972
        %v974 = vmul.f32 %v973, 1.442695
        %v975 = vpow.pop %v974
        %v976 = vsel %vm859, %v975, 0.0
        %977 = vadd.xlane.f32.xlu0 %v976
        %v978 = vpop.xlane.xlu0 %977
        %v979 = vrcp.pop %v978
        %v980 = vmul.f32 %v975, %v979
        %v981 = vpack.c.bf16 %v980, %v980
        %983 = vrot.lane.b32.xlu0 %v811, 64
        %v984 = vpop.permute.xlu0 %983
        %v987 = vsel %vm859, %v981, 0
        %989 = vmatprep.subr.bf16.mxu0 0
        %990 = vmatpush1.bf16.msra.mxu0 %v984
        %991 = vmatprep.subr.bf16.mxu0 0
        %992 = vmatpush1.bf16.msra.mxu0 0
        %993 = vmatprep.subr.bf16.mxu0 0
        %994 = vmatpush1.bf16.msra.mxu0 0
        %995 = vmatprep.subr.bf16.mxu0 0
        %996 = vmatpush1.bf16.msra.mxu0 0
        %997 = vmatprep.subr.bf16.mxu0 0
        %998 = vmatpush1.bf16.msra.mxu0 0
        %999 = vmatprep.subr.bf16.mxu0 0
        %1000 = vmatpush1.bf16.msra.mxu0 0
        %1001 = vmatprep.subr.bf16.mxu0 0
        %1002 = vmatpush1.bf16.msra.mxu0 0
        %1003 = vmatprep.subr.bf16.mxu0 0
        %1004 = vmatpush1.bf16.msra.mxu0 0
        %1005 = vmatprep.subr.bf16.mxu0 0
        %1006 = vmatpush1.bf16.msra.mxu0 0
        %1007 = vmatprep.subr.bf16.mxu0 0
        %1008 = vmatpush1.bf16.msra.mxu0 0
        %1009 = vmatprep.subr.bf16.mxu0 0
        %1010 = vmatpush1.bf16.msra.mxu0 0
        %1011 = vmatprep.subr.bf16.mxu0 0
        %1012 = vmatpush1.bf16.msra.mxu0 0
        %1013 = vmatprep.subr.bf16.mxu0 0
        %1014 = vmatpush1.bf16.msra.mxu0 0
        %1015 = vmatprep.subr.bf16.mxu0 0
        %1016 = vmatpush1.bf16.msra.mxu0 0
        %1017 = vmatprep.subr.bf16.mxu0 0
        %1018 = vmatpush1.bf16.msra.mxu0 0
        %1019 = vmatprep.subr.bf16.mxu0 0
        %1020 = vmatpush1.bf16.msra.mxu0 0
        %1021 = vmatprep.mubr.bf16.mxu0 0
        %1022 = vmatmul.mubr.bf16.gmra.mrb[0].mxu0 %v987
        %v1023 = vpop.f32.mrb[0].mxu0
        %v1024 = vadd.f32 0.0, %v1023
        %v1025 = vpop.f32.mrb[0].mxu0
        %v1026 = vpop.f32.mrb[0].mxu0
        %v1027 = vpop.f32.mrb[0].mxu0
        %1028 = vdwg.mxu0
        %v1029 = vpack.c.bf16 %v1024, %v1024
        %v1031 = vunpack.c.l.b16 %v1029
        %v1032 = vpack.c.b16 %v1031, %v1031
        %1033 = vrot.lane.b32.xlu0 %v1032, 64
        %v1034 = vpop.permute.xlu0 %1033
        %vm1036 = vcmask 1043968
        %1037 = vst.msk [vmem:[#allocation2] sm:$0xf] %vm1036, %v1034
        %v1038 = vld [vmem:[#allocation2] sm:$0xf]
        %v1039 = vld [vmem:[#allocation11] sm:$0xf]
        %v1040 = vld [vmem:[#allocation11 + $0x4] sm:$0xf]
        %v1041 = vld [vmem:[#allocation11 + $0x8] sm:$0xf]
        %v1042 = vld [vmem:[#allocation11 + $0xc] sm:$0xf]
        %v1043 = vld [vmem:[#allocation11 + $0x10] sm:$0xf]
        %v1044 = vld [vmem:[#allocation11 + $0x14] sm:$0xf]
        %v1045 = vld [vmem:[#allocation11 + $0x18] sm:$0xf]
        %v1046 = vld [vmem:[#allocation11 + $0x1c] sm:$0xf]
        %v1047 = vld [vmem:[#allocation11 + $0x20] sm:$0xf]
        %v1048 = vld [vmem:[#allocation11 + $0x24] sm:$0xf]
        %v1049 = vld [vmem:[#allocation11 + $0x28] sm:$0xf]
        %v1050 = vld [vmem:[#allocation11 + $0x2c] sm:$0xf]
        %v1051 = vld [vmem:[#allocation11 + $0x30] sm:$0xf]
        %v1052 = vld [vmem:[#allocation11 + $0x34] sm:$0xf]
        %v1053 = vld [vmem:[#allocation11 + $0x38] sm:$0xf]
        %v1054 = vld [vmem:[#allocation11 + $0x3c] sm:$0xf]
        %v1055 = vld [vmem:[%s6] sm:$0x1]
        %v1057 = vlaneseq
        %v1058 = vshrl.u32 %v1057, 7
        %v1059 = vsub.s32 0, %v1058
        %v1060 = vrot.slane %v1055, %v1059
        %v1078 = vunpack.c.l.b16 %v1039
        %v1079 = vunpack.c.l.b16 %v1040
        %v1080 = vunpack.c.l.b16 %v1041
        %v1081 = vunpack.c.l.b16 %v1042
        %v1082 = vunpack.c.l.b16 %v1043
        %v1083 = vunpack.c.l.b16 %v1044
        %v1084 = vunpack.c.l.b16 %v1045
        %v1085 = vunpack.c.l.b16 %v1046
        %v1086 = vunpack.c.l.b16 %v1047
        %v1087 = vunpack.c.l.b16 %v1048
        %v1088 = vunpack.c.l.b16 %v1049
        %v1089 = vunpack.c.l.b16 %v1050
        %v1090 = vunpack.c.l.b16 %v1051
        %v1091 = vunpack.c.l.b16 %v1052
        %v1092 = vunpack.c.l.b16 %v1053
        %v1093 = vunpack.c.l.b16 %v1054
        %v1094 = vpack.c.b16 %v1079, %v1078
        %v1095 = vpack.c.b16 %v1081, %v1080
        %v1096 = vpack.c.b16 %v1083, %v1082
        %v1097 = vpack.c.b16 %v1085, %v1084
        %v1098 = vpack.c.b16 %v1087, %v1086
        %v1099 = vpack.c.b16 %v1089, %v1088
        %v1100 = vpack.c.b16 %v1091, %v1090
        %v1101 = vpack.c.b16 %v1093, %v1092
        %1110 = vmatprep.subr.bf16.mxu0 0
        %1111 = vmatpush1.bf16.msra.mxu0 %v1094
        %1112 = vmatprep.subr.bf16.mxu0 0
        %1113 = vmatpush1.bf16.msra.mxu0 %v1095
        %1114 = vmatprep.subr.bf16.mxu0 0
        %1115 = vmatpush1.bf16.msra.mxu0 %v1096
        %1116 = vmatprep.subr.bf16.mxu0 0
        %1117 = vmatpush1.bf16.msra.mxu0 %v1097
        %1118 = vmatprep.subr.bf16.mxu0 0
        %1119 = vmatpush1.bf16.msra.mxu0 %v1098
        %1120 = vmatprep.subr.bf16.mxu0 0
        %1121 = vmatpush1.bf16.msra.mxu0 %v1099
        %1122 = vmatprep.subr.bf16.mxu0 0
        %1123 = vmatpush1.bf16.msra.mxu0 %v1100
        %1124 = vmatprep.subr.bf16.mxu0 0
        %1125 = vmatpush1.bf16.msra.mxu0 %v1101
        %1126 = vmatprep.subr.bf16.mxu0 0
        %1127 = vmatpush1.bf16.msra.mxu0 0
        %1128 = vmatprep.subr.bf16.mxu0 0
        %1129 = vmatpush1.bf16.msra.mxu0 0
        %1130 = vmatprep.subr.bf16.mxu0 0
        %1131 = vmatpush1.bf16.msra.mxu0 0
        %1132 = vmatprep.subr.bf16.mxu0 0
        %1133 = vmatpush1.bf16.msra.mxu0 0
        %1134 = vmatprep.subr.bf16.mxu0 0
        %1135 = vmatpush1.bf16.msra.mxu0 0
        %1136 = vmatprep.subr.bf16.mxu0 0
        %1137 = vmatpush1.bf16.msra.mxu0 0
        %1138 = vmatprep.subr.bf16.mxu0 0
        %1139 = vmatpush1.bf16.msra.mxu0 0
        %1140 = vmatprep.subr.bf16.mxu0 0
        %1141 = vmatpush1.bf16.msra.mxu0 0
        %1142 = vmatprep.mubr.bf16.mxu0 0
        %1143 = vmatmul.mubr.bf16.gmra.mrb[0].mxu0 %v1038
        %v1144 = vpop.f32.mrb[0].mxu0
        %v1145 = vadd.f32 %v1060, %v1144
        %v1146 = vpop.f32.mrb[0].mxu0
        %v1147 = vpop.f32.mrb[0].mxu0
        %v1148 = vpop.f32.mrb[0].mxu0
        %1149 = vdwg.mxu0
        %1150 = vadd.xlane.f32.xlu0 %v1145
        %v1151 = vpop.xlane.xlu0 %1150
        %v1152 = vrcp.pop 128.0
        %v1153 = vmul.f32 %v1151, %v1152
        %v1154 = vsub.f32 %v1145, %v1153
        %v1155 = vmul.f32 %v1154, %v1154
        %1156 = vadd.xlane.f32.xlu0 %v1155
        %v1157 = vpop.xlane.xlu0 %1156
        %v1158 = vmul.f32 %v1157, %v1152
        %v1159 = vadd.f32 %v1158, 1e-05
        %v1160 = vrsqrt.pop %v1159
        %v1161 = vmul.f32 %v1154, %v1160
        %v1162 = vld [vmem:[%s7] sm:$0x1]
        %v1164 = vlaneseq
        %v1165 = vshrl.u32 %v1164, 7
        %v1166 = vsub.s32 0, %v1165
        %v1167 = vrot.slane %v1162, %v1166
        %v1169 = vmul.f32 %v1161, %v1167
        %v1170 = vld [vmem:[%s8] sm:$0x1]
        %v1172 = vlaneseq
        %v1173 = vshrl.u32 %v1172, 7
        %v1174 = vsub.s32 0, %v1173
        %v1175 = vrot.slane %v1170, %v1174
        %v1177 = vadd.f32 %v1169, %v1175
        %v1178 = vadd.f32 %v472, %v1177
        %1179 = vst [vmem:[%s470] sm:$0xff] %v1178
        %s1180 = sand.u32 %s258, 1
        %s1181 = scalar_lea.sflag [#allocation5], %s1180
        %s1182 = sand.u32 %s258, 1
        %s1183 = smul.addr %s1182, 8
        %s1184 = scalar_lea.vmem [#allocation12], %s1183
        // Predicated region
        $region77: #{tpu_custom_call.1} parent=55 // pred_check
          %p1185 = pneg %p268
        $region78: #{tpu_custom_call.1} parent=55 // pred_check_branch
          %1187 = sbr.rel (%p1185) target = $region80
        $region79: #{tpu_custom_call.1} parent=55 // pred_region
          %s1189 = ssub.s32 128, 128
          %1190 = vsyncadd %s1181, %s1189
          %s1191 = sadd.s32 %s35, %s34
          %s1192 = smul.addr %s1191, 128
          %s1193 = scalar_lea.hbm %s9, %s1192
          %s1195 = sshll.u32 %s1184, 4
          %s1196 = int_to_ptr.vmem [resolvable:$true] %s1195
          %1198 = dma.vmem_to_hbm [thread:$0]  %s1196, 128, %s1193, %s1181
        $region80: #{tpu_custom_call.1} parent=55 // pred_fallthru
          _
      $region56: #{tpu_custom_call.1} parent=5 // pred_fallthru
        _
      %p1199 = scmp.le.s32.totalorder 2, %s25
      // Predicated region
      $region81: #{tpu_custom_call.1} parent=5 // pred_check
        %p1200 = pneg %p1199
      $region82: #{tpu_custom_call.1} parent=5 // pred_check_branch
        %1202 = sbr.rel (%p1200) target = $region84
      $region83: #{tpu_custom_call.1} parent=5 // pred_region
        %s1203 = ssub.s32 %s25, 2
        // Predicated region
        $region85: #{tpu_custom_call.1} parent=83 // pred_check
          %p1204 = pneg %p274
        $region86: #{tpu_custom_call.1} parent=83 // pred_check_branch
          %1206 = sbr.rel (%p1204) target = $region88
        $region87: #{tpu_custom_call.1} parent=83 // pred_region
          %s1207 = sand.u32 %s259, 1
          %s1208 = scalar_lea.sflag [#allocation5], %s1207
          %s1209 = sand.u32 %s259, 1
          %s1210 = smul.addr %s1209, 8
          %s1211 = scalar_lea.vmem [#allocation12], %s1210
          %1212 = dma.done %s1208, 128
        $region88: #{tpu_custom_call.1} parent=83 // pred_fallthru
          _
      $region84: #{tpu_custom_call.1} parent=5 // pred_fallthru
        _
    $region6: #{tpu_custom_call.1} parent=1 // loop_footer
      %s29 = sadd.s32 1, %s25
    $region7: #{tpu_custom_call.1} parent=1 // loop_footer_branch
      %24 = sbr.rel target = $region3
    $region8: #{tpu_custom_call.1} parent=1 // loop_exit
      _
    %1213 = vsyncpa [#allocation4], 1
    %s1214 = scalar_lea.sflag [#allocation4], 1
    %1215 = vsyncpa %s1214, 1
    %1216 = vsyncpa [#allocation7], 1
    %s1217 = scalar_lea.sflag [#allocation7], 1
    %1218 = vsyncpa %s1217, 1
    %1219 = vsyncpa [#allocation10], 1
    %1220 = vsyncpa [#allocation5], 1
    %s1221 = scalar_lea.sflag [#allocation5], 1
    %1222 = vsyncpa %s1221, 1

</llo_original>
